<compile_context>
chip_gen: v5e
topology: v5e:2x2
jax: 0.10.0
libtpu: 0.0.40
codegen_flags: <defaults>
</compile_context>

<pallas_src>
import functools

import jax
import jax.numpy as jnp
from jax.experimental import pallas as pl
from jax.experimental.pallas import tpu as pltpu


def _steering_kernel(x_ref,
                     wih0_ref, whh0_ref, b0_ref,
                     wih1_ref, whh1_ref, b1_ref,
                     wh_ref, bh_ref, wo_ref, bo_ref,
                     out_ref,
                     z0_scr, h1_scr):
    T = x_ref.shape[0]
    H = whh0_ref.shape[0]

    # ---- Hoisted (non-recurrent) work: layer-0 input projection for all t ----
    # One (T, in) x (in, 4H) matmul on the MXU instead of T matvecs.
    z0_scr[...] = (jnp.dot(x_ref[...], wih0_ref[...],
                           preferred_element_type=jnp.float32)
                   + b0_ref[...])

    # Hoist weight loads out of the time loop (values stay vreg/VMEM resident).
    whh0 = whh0_ref[...]
    wih1 = wih1_ref[...]
    whh1 = whh1_ref[...]
    b1 = b1_ref[...]

    def gates(z, c):
        # PyTorch gate order: i, f, g, o
        i = jax.nn.sigmoid(z[:, 0 * H:1 * H])
        f = jax.nn.sigmoid(z[:, 1 * H:2 * H])
        g = jnp.tanh(z[:, 2 * H:3 * H])
        o = jax.nn.sigmoid(z[:, 3 * H:4 * H])
        c_new = f * c + i * g
        h_new = o * jnp.tanh(c_new)
        return h_new, c_new

    def step(t, carry):
        h0, c0, h1, c1 = carry
        # Layer 0: only the recurrent term is on the serial chain now.
        z0 = z0_scr[pl.ds(t, 1), :] + jnp.dot(h0, whh0,
                                              preferred_element_type=jnp.float32)
        h0, c0 = gates(z0, c0)
        # Layer 1.
        z1 = (jnp.dot(h0, wih1, preferred_element_type=jnp.float32)
              + jnp.dot(h1, whh1, preferred_element_type=jnp.float32)
              + b1)
        h1, c1 = gates(z1, c1)
        # Stash h1_t for the deferred dense head.
        h1_scr[pl.ds(t, 1), :] = h1
        return (h0, c0, h1, c1)

    zero = jnp.zeros((1, H), jnp.float32)
    # State carried in vregs; unroll short static loops for LLO scheduling.
    jax.lax.fori_loop(0, T, step, (zero, zero, zero, zero),
                      unroll=bool(T <= 16))

    # ---- Deferred dense head over all timesteps at once ----
    hid = jnp.tanh(jnp.dot(h1_scr[...], wh_ref[...],
                           preferred_element_type=jnp.float32) + bh_ref[...])
    # dropout: identity at inference (eval mode)
    out_ref[...] = (jnp.dot(hid, wo_ref[...],
                            preferred_element_type=jnp.float32) + bo_ref[...])


@functools.partial(jax.jit, static_argnames=())
def steering_forward(x, params):
    """x: (T, input_size) float32 -> (T, 1, output_size) float32."""
    T, input_size = x.shape
    wih0, whh0, b0, wih1, whh1, b1, wh, bh, wo, bo = params
    H = whh0.shape[0]
    O = wo.shape[1]

    full = lambda shape: pl.BlockSpec(shape, lambda i: tuple(0 for _ in shape))

    out = pl.pallas_call(
        _steering_kernel,
        out_shape=jax.ShapeDtypeStruct((T, O), jnp.float32),
        grid_spec=pltpu.PrefetchScalarGridSpec(
            num_scalar_prefetch=0,
            grid=(1,),  # single invocation: the recurrence lives inside the kernel
            in_specs=[
                full((T, input_size)),                       # x, whole sequence
                full(wih0.shape), full(whh0.shape), full(b0.shape),
                full(wih1.shape), full(whh1.shape), full(b1.shape),
                full(wh.shape), full(bh.shape), full(wo.shape), full(bo.shape),
            ],
            out_specs=full((T, O)),
            scratch_shapes=[
                pltpu.VMEM((T, 4 * H), jnp.float32),  # Z0 = x @ Wih0 + b0
                pltpu.VMEM((T, H), jnp.float32),      # h1_t for all t
            ],
        ),
        compiler_params=pltpu.CompilerParams(
            dimension_semantics=("arbitrary",)),
    )(x, wih0, whh0, b0, wih1, whh1, b1, wh, bh, wo, bo)

    return out.reshape(T, 1, O)


def init_params(key, input_size, H, HL, O):
    """Deterministic parameters, PyTorch-style uniform(-k, k) init."""
    ks = jax.random.split(key, 10)
    k_lstm = 1.0 / jnp.sqrt(H)

    def u(k, shape, bound):
        return jax.random.uniform(k, shape, jnp.float32, -bound, bound)

    # Stored pre-transposed: (in_dim, 4H) so the kernel does x @ W.
    wih0 = u(ks[0], (input_size, 4 * H), k_lstm)
    whh0 = u(ks[1], (H, 4 * H), k_lstm)
    b0 = u(ks[2], (1, 4 * H), k_lstm) + u(ks[3], (1, 4 * H), k_lstm)  # b_ih + b_hh
    wih1 = u(ks[4], (H, 4 * H), k_lstm)
    whh1 = u(ks[5], (H, 4 * H), k_lstm)
    b1 = u(ks[6], (1, 4 * H), k_lstm) + u(ks[7], (1, 4 * H), k_lstm)

    k_h = 1.0 / jnp.sqrt(H)
    wh = u(ks[8], (H, HL), k_h)
    bh = jnp.zeros((1, HL), jnp.float32)
    k_o = 1.0 / jnp.sqrt(HL)
    wo = u(ks[9], (HL, O), k_o)
    bo = jnp.zeros((1, O), jnp.float32)
    return (wih0, whh0, b0, wih1, whh1, b1, wh, bh, wo, bo)


def steering_reference(x, params):
    """Pure-JAX reference (same math as torch.nn.LSTM, batch=1, eval mode)."""
    wih0, whh0, b0, wih1, whh1, b1, wh, bh, wo, bo = params
    H = whh0.shape[0]

    def cell(x_t, h, c, wih, whh, b):
        z = x_t @ wih + h @ whh + b
        i = jax.nn.sigmoid(z[:, 0 * H:1 * H])
        f = jax.nn.sigmoid(z[:, 1 * H:2 * H])
        g = jnp.tanh(z[:, 2 * H:3 * H])
        o = jax.nn.sigmoid(z[:, 3 * H:4 * H])
        c_new = f * c + i * g
        return o * jnp.tanh(c_new), c_new

    def step(carry, x_t):
        (h0, c0, h1, c1) = carry
        x_t = x_t[None, :]
        h0, c0 = cell(x_t, h0, c0, wih0, whh0, b0)
        h1, c1 = cell(h0, h1, c1, wih1, whh1, b1)
        hid = jnp.tanh(h1 @ wh + bh)
        out = hid @ wo + bo
        return (h0, c0, h1, c1), out[0]

    z = jnp.zeros((1, H), jnp.float32)
    _, outs = jax.lax.scan(step, (z, z, z, z), x)
    return outs[:, None, :]


if __name__ == "__main__":
    # Small shapes consistent with the module's forward (batch == 1).
    T = 8                 # sequence length (len(x))
    input_size = 16
    lstm_hidden_size = 32
    hidden_layer_size = 32
    output_size = 1
    # num_layers = 2, batch_size = 1, dropout_prob irrelevant at inference

    key = jax.random.PRNGKey(0)
    kx, kp = jax.random.split(key)
    x = jax.random.normal(kx, (T, input_size), jnp.float32)
    params = init_params(kp, input_size, lstm_hidden_size,
                         hidden_layer_size, output_size)

    out = steering_forward(x, params)
    out = jax.block_until_ready(out)

    ref = steering_reference(x, params)
    assert out.shape == (T, 1, output_size)
    assert jnp.allclose(out, ref, atol=1e-5, rtol=1e-5), (out, ref)

    print("KERNEL_OK")
</pallas_src>

<mosaic_0001>
module attributes {stable_mosaic.version = 11 : i64} {
  func.func @_steering_kernel(%arg0: i32, %arg1: memref<8x16xf32, #tpu.memory_space<vmem>>, %arg2: memref<16x128xf32, #tpu.memory_space<vmem>>, %arg3: memref<32x128xf32, #tpu.memory_space<vmem>>, %arg4: memref<1x128xf32, #tpu.memory_space<vmem>>, %arg5: memref<32x128xf32, #tpu.memory_space<vmem>>, %arg6: memref<32x128xf32, #tpu.memory_space<vmem>>, %arg7: memref<1x128xf32, #tpu.memory_space<vmem>>, %arg8: memref<32x32xf32, #tpu.memory_space<vmem>>, %arg9: memref<1x32xf32, #tpu.memory_space<vmem>>, %arg10: memref<32x1xf32, #tpu.memory_space<vmem>>, %arg11: memref<1x1xf32, #tpu.memory_space<vmem>>, %arg12: memref<8x1xf32, #tpu.memory_space<vmem>>, %arg13: memref<8x128xf32, #tpu.memory_space<vmem>>, %arg14: memref<8x32xf32, #tpu.memory_space<vmem>>) attributes {dimension_semantics = [#tpu.dimension_semantics<arbitrary>], iteration_bounds = array<i64: 1>, scalar_prefetch = 0 : i64, scratch_operands = 2 : i64, tpu.core_type = #tpu.core_type<tc>, window_params = [{pipeline_mode = #tpu.pipeline_mode<synchronous>, transform_indices = @transform_0, window_bounds = array<i64: 8, 16>}, {pipeline_mode = #tpu.pipeline_mode<synchronous>, transform_indices = @transform_1, window_bounds = array<i64: 16, 128>}, {pipeline_mode = #tpu.pipeline_mode<synchronous>, transform_indices = @transform_2, window_bounds = array<i64: 32, 128>}, {pipeline_mode = #tpu.pipeline_mode<synchronous>, transform_indices = @transform_3, window_bounds = array<i64: 1, 128>}, {pipeline_mode = #tpu.pipeline_mode<synchronous>, transform_indices = @transform_4, window_bounds = array<i64: 32, 128>}, {pipeline_mode = #tpu.pipeline_mode<synchronous>, transform_indices = @transform_5, window_bounds = array<i64: 32, 128>}, {pipeline_mode = #tpu.pipeline_mode<synchronous>, transform_indices = @transform_6, window_bounds = array<i64: 1, 128>}, {pipeline_mode = #tpu.pipeline_mode<synchronous>, transform_indices = @transform_7, window_bounds = array<i64: 32, 32>}, {pipeline_mode = #tpu.pipeline_mode<synchronous>, transform_indices = @transform_8, window_bounds = array<i64: 1, 32>}, {pipeline_mode = #tpu.pipeline_mode<synchronous>, transform_indices = @transform_9, window_bounds = array<i64: 32, 1>}, {pipeline_mode = #tpu.pipeline_mode<synchronous>, transform_indices = @transform_10, window_bounds = array<i64: 1, 1>}, {pipeline_mode = #tpu.pipeline_mode<synchronous>, transform_indices = @transform_11, window_bounds = array<i64: 8, 1>}]} {
    %c0 = arith.constant 0 : index
    %c0_0 = arith.constant 0 : index
    %0 = vector.load %arg1[%c0, %c0_0] : memref<8x16xf32, #tpu.memory_space<vmem>>, vector<8x16xf32>
    %c0_1 = arith.constant 0 : index
    %c0_2 = arith.constant 0 : index
    %1 = vector.load %arg2[%c0_1, %c0_2] : memref<16x128xf32, #tpu.memory_space<vmem>>, vector<16x128xf32>
    %cst = arith.constant dense<0.000000e+00> : vector<8x128xf32>
    %2 = tpu.matmul %0, %1, %cst {dimension_numbers = #tpu.dot_dimension_numbers<[1], [0], [0], [1], [0, 0, 1, 1], [], []>} : vector<8x16xf32>, vector<16x128xf32>, vector<8x128xf32> -> vector<8x128xf32>
    %c0_3 = arith.constant 0 : index
    %c0_4 = arith.constant 0 : index
    %3 = vector.load %arg4[%c0_3, %c0_4] : memref<1x128xf32, #tpu.memory_space<vmem>>, vector<1x128xf32>
    %4 = vector.broadcast %3 : vector<1x128xf32> to vector<8x128xf32>
    %5 = arith.addf %2, %4 : vector<8x128xf32>
    %c0_5 = arith.constant 0 : index
    %c0_6 = arith.constant 0 : index
    %6 = vector.load %arg13[%c0_5, %c0_6] : memref<8x128xf32, #tpu.memory_space<vmem>>, vector<8x128xf32>
    tpu.vector_store %arg13[%c0_5, %c0_6], %5 {strides = array<i32>} : memref<8x128xf32, #tpu.memory_space<vmem>>, vector<8x128xf32>,
    %c0_7 = arith.constant 0 : index
    %c0_8 = arith.constant 0 : index
    %7 = vector.load %arg3[%c0_7, %c0_8] : memref<32x128xf32, #tpu.memory_space<vmem>>, vector<32x128xf32>
    %c0_9 = arith.constant 0 : index
    %c0_10 = arith.constant 0 : index
    %8 = vector.load %arg5[%c0_9, %c0_10] : memref<32x128xf32, #tpu.memory_space<vmem>>, vector<32x128xf32>
    %c0_11 = arith.constant 0 : index
    %c0_12 = arith.constant 0 : index
    %9 = vector.load %arg6[%c0_11, %c0_12] : memref<32x128xf32, #tpu.memory_space<vmem>>, vector<32x128xf32>
    %c0_13 = arith.constant 0 : index
    %c0_14 = arith.constant 0 : index
    %10 = vector.load %arg7[%c0_13, %c0_14] : memref<1x128xf32, #tpu.memory_space<vmem>>, vector<1x128xf32>
    %cst_15 = arith.constant 0.000000e+00 : f32
    %11 = vector.broadcast %cst_15 : f32 to vector<1x32xf32>
    %c0_i32 = arith.constant 0 : i32
    %12 = arith.index_cast %c0_i32 : i32 to index
    %c0_16 = arith.constant 0 : index
    %13 = vector.load %arg13[%12, %c0_16] : memref<8x128xf32, #tpu.memory_space<vmem>>, vector<1x128xf32>
    %cst_17 = arith.constant dense<0.000000e+00> : vector<1x128xf32>
    %14 = tpu.matmul %11, %7, %cst_17 {dimension_numbers = #tpu.dot_dimension_numbers<[1], [0], [0], [1], [0, 0, 1, 1], [], []>} : vector<1x32xf32>, vector<32x128xf32>, vector<1x128xf32> -> vector<1x128xf32>
    %15 = arith.addf %13, %14 : vector<1x128xf32>
    %16 = vector.extract_strided_slice %15 {offsets = [0, 0], sizes = [1, 32], strides = [1, 1]} : vector<1x128xf32> to vector<1x32xf32>
    %17 = arith.negf %16 : vector<1x32xf32>
    %18 = math.exp %17 : vector<1x32xf32>
    %cst_18 = arith.constant 1.000000e+00 : f32
    %19 = vector.broadcast %cst_18 : f32 to vector<1x32xf32>
    %20 = arith.addf %19, %18 : vector<1x32xf32>
    %21 = arith.divf %19, %20 : vector<1x32xf32>
    %22 = vector.extract_strided_slice %15 {offsets = [0, 32], sizes = [1, 32], strides = [1, 1]} : vector<1x128xf32> to vector<1x32xf32>
    %23 = arith.negf %22 : vector<1x32xf32>
    %24 = math.exp %23 : vector<1x32xf32>
    %cst_19 = arith.constant 1.000000e+00 : f32
    %25 = vector.broadcast %cst_19 : f32 to vector<1x32xf32>
    %26 = arith.addf %25, %24 : vector<1x32xf32>
    %27 = arith.divf %25, %26 : vector<1x32xf32>
    %28 = vector.extract_strided_slice %15 {offsets = [0, 64], sizes = [1, 32], strides = [1, 1]} : vector<1x128xf32> to vector<1x32xf32>
    %29 = math.tanh %28 : vector<1x32xf32>
    %30 = vector.extract_strided_slice %15 {offsets = [0, 96], sizes = [1, 32], strides = [1, 1]} : vector<1x128xf32> to vector<1x32xf32>
    %31 = arith.negf %30 : vector<1x32xf32>
    %32 = math.exp %31 : vector<1x32xf32>
    %cst_20 = arith.constant 1.000000e+00 : f32
    %33 = vector.broadcast %cst_20 : f32 to vector<1x32xf32>
    %34 = arith.addf %33, %32 : vector<1x32xf32>
    %35 = arith.divf %33, %34 : vector<1x32xf32>
    %36 = arith.mulf %27, %11 : vector<1x32xf32>
    %37 = arith.mulf %21, %29 : vector<1x32xf32>
    %38 = arith.addf %36, %37 : vector<1x32xf32>
    %39 = math.tanh %38 : vector<1x32xf32>
    %40 = arith.mulf %35, %39 : vector<1x32xf32>
    %cst_21 = arith.constant dense<0.000000e+00> : vector<1x128xf32>
    %41 = tpu.matmul %40, %8, %cst_21 {dimension_numbers = #tpu.dot_dimension_numbers<[1], [0], [0], [1], [0, 0, 1, 1], [], []>} : vector<1x32xf32>, vector<32x128xf32>, vector<1x128xf32> -> vector<1x128xf32>
    %cst_22 = arith.constant dense<0.000000e+00> : vector<1x128xf32>
    %42 = tpu.matmul %11, %9, %cst_22 {dimension_numbers = #tpu.dot_dimension_numbers<[1], [0], [0], [1], [0, 0, 1, 1], [], []>} : vector<1x32xf32>, vector<32x128xf32>, vector<1x128xf32> -> vector<1x128xf32>
    %43 = arith.addf %41, %42 : vector<1x128xf32>
    %44 = arith.addf %43, %10 : vector<1x128xf32>
    %45 = vector.extract_strided_slice %44 {offsets = [0, 0], sizes = [1, 32], strides = [1, 1]} : vector<1x128xf32> to vector<1x32xf32>
    %46 = arith.negf %45 : vector<1x32xf32>
    %47 = math.exp %46 : vector<1x32xf32>
    %cst_23 = arith.constant 1.000000e+00 : f32
    %48 = vector.broadcast %cst_23 : f32 to vector<1x32xf32>
    %49 = arith.addf %48, %47 : vector<1x32xf32>
    %50 = arith.divf %48, %49 : vector<1x32xf32>
    %51 = vector.extract_strided_slice %44 {offsets = [0, 32], sizes = [1, 32], strides = [1, 1]} : vector<1x128xf32> to vector<1x32xf32>
    %52 = arith.negf %51 : vector<1x32xf32>
    %53 = math.exp %52 : vector<1x32xf32>
    %cst_24 = arith.constant 1.000000e+00 : f32
    %54 = vector.broadcast %cst_24 : f32 to vector<1x32xf32>
    %55 = arith.addf %54, %53 : vector<1x32xf32>
    %56 = arith.divf %54, %55 : vector<1x32xf32>
    %57 = vector.extract_strided_slice %44 {offsets = [0, 64], sizes = [1, 32], strides = [1, 1]} : vector<1x128xf32> to vector<1x32xf32>
    %58 = math.tanh %57 : vector<1x32xf32>
    %59 = vector.extract_strided_slice %44 {offsets = [0, 96], sizes = [1, 32], strides = [1, 1]} : vector<1x128xf32> to vector<1x32xf32>
    %60 = arith.negf %59 : vector<1x32xf32>
    %61 = math.exp %60 : vector<1x32xf32>
    %cst_25 = arith.constant 1.000000e+00 : f32
    %62 = vector.broadcast %cst_25 : f32 to vector<1x32xf32>
    %63 = arith.addf %62, %61 : vector<1x32xf32>
    %64 = arith.divf %62, %63 : vector<1x32xf32>
    %65 = arith.mulf %56, %11 : vector<1x32xf32>
    %66 = arith.mulf %50, %58 : vector<1x32xf32>
    %67 = arith.addf %65, %66 : vector<1x32xf32>
    %68 = math.tanh %67 : vector<1x32xf32>
    %69 = arith.mulf %64, %68 : vector<1x32xf32>
    %70 = arith.index_cast %c0_i32 : i32 to index
    %c0_26 = arith.constant 0 : index
    %71 = vector.load %arg14[%70, %c0_26] : memref<8x32xf32, #tpu.memory_space<vmem>>, vector<1x32xf32>
    tpu.vector_store %arg14[%70, %c0_26], %69 {strides = array<i32>} : memref<8x32xf32, #tpu.memory_space<vmem>>, vector<1x32xf32>,
    %c1_i32 = arith.constant 1 : i32
    %72 = arith.index_cast %c1_i32 : i32 to index
    %c0_27 = arith.constant 0 : index
    %73 = vector.load %arg13[%72, %c0_27] : memref<8x128xf32, #tpu.memory_space<vmem>>, vector<1x128xf32>
    %cst_28 = arith.constant dense<0.000000e+00> : vector<1x128xf32>
    %74 = tpu.matmul %40, %7, %cst_28 {dimension_numbers = #tpu.dot_dimension_numbers<[1], [0], [0], [1], [0, 0, 1, 1], [], []>} : vector<1x32xf32>, vector<32x128xf32>, vector<1x128xf32> -> vector<1x128xf32>
    %75 = arith.addf %73, %74 : vector<1x128xf32>
    %76 = vector.extract_strided_slice %75 {offsets = [0, 0], sizes = [1, 32], strides = [1, 1]} : vector<1x128xf32> to vector<1x32xf32>
    %77 = arith.negf %76 : vector<1x32xf32>
    %78 = math.exp %77 : vector<1x32xf32>
    %cst_29 = arith.constant 1.000000e+00 : f32
    %79 = vector.broadcast %cst_29 : f32 to vector<1x32xf32>
    %80 = arith.addf %79, %78 : vector<1x32xf32>
    %81 = arith.divf %79, %80 : vector<1x32xf32>
    %82 = vector.extract_strided_slice %75 {offsets = [0, 32], sizes = [1, 32], strides = [1, 1]} : vector<1x128xf32> to vector<1x32xf32>
    %83 = arith.negf %82 : vector<1x32xf32>
    %84 = math.exp %83 : vector<1x32xf32>
    %cst_30 = arith.constant 1.000000e+00 : f32
    %85 = vector.broadcast %cst_30 : f32 to vector<1x32xf32>
    %86 = arith.addf %85, %84 : vector<1x32xf32>
    %87 = arith.divf %85, %86 : vector<1x32xf32>
    %88 = vector.extract_strided_slice %75 {offsets = [0, 64], sizes = [1, 32], strides = [1, 1]} : vector<1x128xf32> to vector<1x32xf32>
    %89 = math.tanh %88 : vector<1x32xf32>
    %90 = vector.extract_strided_slice %75 {offsets = [0, 96], sizes = [1, 32], strides = [1, 1]} : vector<1x128xf32> to vector<1x32xf32>
    %91 = arith.negf %90 : vector<1x32xf32>
    %92 = math.exp %91 : vector<1x32xf32>
    %cst_31 = arith.constant 1.000000e+00 : f32
    %93 = vector.broadcast %cst_31 : f32 to vector<1x32xf32>
    %94 = arith.addf %93, %92 : vector<1x32xf32>
    %95 = arith.divf %93, %94 : vector<1x32xf32>
    %96 = arith.mulf %87, %38 : vector<1x32xf32>
    %97 = arith.mulf %81, %89 : vector<1x32xf32>
    %98 = arith.addf %96, %97 : vector<1x32xf32>
    %99 = math.tanh %98 : vector<1x32xf32>
    %100 = arith.mulf %95, %99 : vector<1x32xf32>
    %cst_32 = arith.constant dense<0.000000e+00> : vector<1x128xf32>
    %101 = tpu.matmul %100, %8, %cst_32 {dimension_numbers = #tpu.dot_dimension_numbers<[1], [0], [0], [1], [0, 0, 1, 1], [], []>} : vector<1x32xf32>, vector<32x128xf32>, vector<1x128xf32> -> vector<1x128xf32>
    %cst_33 = arith.constant dense<0.000000e+00> : vector<1x128xf32>
    %102 = tpu.matmul %69, %9, %cst_33 {dimension_numbers = #tpu.dot_dimension_numbers<[1], [0], [0], [1], [0, 0, 1, 1], [], []>} : vector<1x32xf32>, vector<32x128xf32>, vector<1x128xf32> -> vector<1x128xf32>
    %103 = arith.addf %101, %102 : vector<1x128xf32>
    %104 = arith.addf %103, %10 : vector<1x128xf32>
    %105 = vector.extract_strided_slice %104 {offsets = [0, 0], sizes = [1, 32], strides = [1, 1]} : vector<1x128xf32> to vector<1x32xf32>
    %106 = arith.negf %105 : vector<1x32xf32>
    %107 = math.exp %106 : vector<1x32xf32>
    %cst_34 = arith.constant 1.000000e+00 : f32
    %108 = vector.broadcast %cst_34 : f32 to vector<1x32xf32>
    %109 = arith.addf %108, %107 : vector<1x32xf32>
    %110 = arith.divf %108, %109 : vector<1x32xf32>
    %111 = vector.extract_strided_slice %104 {offsets = [0, 32], sizes = [1, 32], strides = [1, 1]} : vector<1x128xf32> to vector<1x32xf32>
    %112 = arith.negf %111 : vector<1x32xf32>
    %113 = math.exp %112 : vector<1x32xf32>
    %cst_35 = arith.constant 1.000000e+00 : f32
    %114 = vector.broadcast %cst_35 : f32 to vector<1x32xf32>
    %115 = arith.addf %114, %113 : vector<1x32xf32>
    %116 = arith.divf %114, %115 : vector<1x32xf32>
    %117 = vector.extract_strided_slice %104 {offsets = [0, 64], sizes = [1, 32], strides = [1, 1]} : vector<1x128xf32> to vector<1x32xf32>
    %118 = math.tanh %117 : vector<1x32xf32>
    %119 = vector.extract_strided_slice %104 {offsets = [0, 96], sizes = [1, 32], strides = [1, 1]} : vector<1x128xf32> to vector<1x32xf32>
    %120 = arith.negf %119 : vector<1x32xf32>
    %121 = math.exp %120 : vector<1x32xf32>
    %cst_36 = arith.constant 1.000000e+00 : f32
    %122 = vector.broadcast %cst_36 : f32 to vector<1x32xf32>
    %123 = arith.addf %122, %121 : vector<1x32xf32>
    %124 = arith.divf %122, %123 : vector<1x32xf32>
    %125 = arith.mulf %116, %67 : vector<1x32xf32>
    %126 = arith.mulf %110, %118 : vector<1x32xf32>
    %127 = arith.addf %125, %126 : vector<1x32xf32>
    %128 = math.tanh %127 : vector<1x32xf32>
    %129 = arith.mulf %124, %128 : vector<1x32xf32>
    %130 = arith.index_cast %c1_i32 : i32 to index
    %c0_37 = arith.constant 0 : index
    %131 = vector.load %arg14[%130, %c0_37] : memref<8x32xf32, #tpu.memory_space<vmem>>, vector<1x32xf32>
    tpu.vector_store %arg14[%130, %c0_37], %129 {strides = array<i32>} : memref<8x32xf32, #tpu.memory_space<vmem>>, vector<1x32xf32>,
    %c2_i32 = arith.constant 2 : i32
    %132 = arith.index_cast %c2_i32 : i32 to index
    %c0_38 = arith.constant 0 : index
    %133 = vector.load %arg13[%132, %c0_38] : memref<8x128xf32, #tpu.memory_space<vmem>>, vector<1x128xf32>
    %cst_39 = arith.constant dense<0.000000e+00> : vector<1x128xf32>
    %134 = tpu.matmul %100, %7, %cst_39 {dimension_numbers = #tpu.dot_dimension_numbers<[1], [0], [0], [1], [0, 0, 1, 1], [], []>} : vector<1x32xf32>, vector<32x128xf32>, vector<1x128xf32> -> vector<1x128xf32>
    %135 = arith.addf %133, %134 : vector<1x128xf32>
    %136 = vector.extract_strided_slice %135 {offsets = [0, 0], sizes = [1, 32], strides = [1, 1]} : vector<1x128xf32> to vector<1x32xf32>
    %137 = arith.negf %136 : vector<1x32xf32>
    %138 = math.exp %137 : vector<1x32xf32>
    %cst_40 = arith.constant 1.000000e+00 : f32
    %139 = vector.broadcast %cst_40 : f32 to vector<1x32xf32>
    %140 = arith.addf %139, %138 : vector<1x32xf32>
    %141 = arith.divf %139, %140 : vector<1x32xf32>
    %142 = vector.extract_strided_slice %135 {offsets = [0, 32], sizes = [1, 32], strides = [1, 1]} : vector<1x128xf32> to vector<1x32xf32>
    %143 = arith.negf %142 : vector<1x32xf32>
    %144 = math.exp %143 : vector<1x32xf32>
    %cst_41 = arith.constant 1.000000e+00 : f32
    %145 = vector.broadcast %cst_41 : f32 to vector<1x32xf32>
    %146 = arith.addf %145, %144 : vector<1x32xf32>
    %147 = arith.divf %145, %146 : vector<1x32xf32>
    %148 = vector.extract_strided_slice %135 {offsets = [0, 64], sizes = [1, 32], strides = [1, 1]} : vector<1x128xf32> to vector<1x32xf32>
    %149 = math.tanh %148 : vector<1x32xf32>
    %150 = vector.extract_strided_slice %135 {offsets = [0, 96], sizes = [1, 32], strides = [1, 1]} : vector<1x128xf32> to vector<1x32xf32>
    %151 = arith.negf %150 : vector<1x32xf32>
    %152 = math.exp %151 : vector<1x32xf32>
    %cst_42 = arith.constant 1.000000e+00 : f32
    %153 = vector.broadcast %cst_42 : f32 to vector<1x32xf32>
    %154 = arith.addf %153, %152 : vector<1x32xf32>
    %155 = arith.divf %153, %154 : vector<1x32xf32>
    %156 = arith.mulf %147, %98 : vector<1x32xf32>
    %157 = arith.mulf %141, %149 : vector<1x32xf32>
    %158 = arith.addf %156, %157 : vector<1x32xf32>
    %159 = math.tanh %158 : vector<1x32xf32>
    %160 = arith.mulf %155, %159 : vector<1x32xf32>
    %cst_43 = arith.constant dense<0.000000e+00> : vector<1x128xf32>
    %161 = tpu.matmul %160, %8, %cst_43 {dimension_numbers = #tpu.dot_dimension_numbers<[1], [0], [0], [1], [0, 0, 1, 1], [], []>} : vector<1x32xf32>, vector<32x128xf32>, vector<1x128xf32> -> vector<1x128xf32>
    %cst_44 = arith.constant dense<0.000000e+00> : vector<1x128xf32>
    %162 = tpu.matmul %129, %9, %cst_44 {dimension_numbers = #tpu.dot_dimension_numbers<[1], [0], [0], [1], [0, 0, 1, 1], [], []>} : vector<1x32xf32>, vector<32x128xf32>, vector<1x128xf32> -> vector<1x128xf32>
    %163 = arith.addf %161, %162 : vector<1x128xf32>
    %164 = arith.addf %163, %10 : vector<1x128xf32>
    %165 = vector.extract_strided_slice %164 {offsets = [0, 0], sizes = [1, 32], strides = [1, 1]} : vector<1x128xf32> to vector<1x32xf32>
    %166 = arith.negf %165 : vector<1x32xf32>
    %167 = math.exp %166 : vector<1x32xf32>
    %cst_45 = arith.constant 1.000000e+00 : f32
    %168 = vector.broadcast %cst_45 : f32 to vector<1x32xf32>
    %169 = arith.addf %168, %167 : vector<1x32xf32>
    %170 = arith.divf %168, %169 : vector<1x32xf32>
    %171 = vector.extract_strided_slice %164 {offsets = [0, 32], sizes = [1, 32], strides = [1, 1]} : vector<1x128xf32> to vector<1x32xf32>
    %172 = arith.negf %171 : vector<1x32xf32>
    %173 = math.exp %172 : vector<1x32xf32>
    %cst_46 = arith.constant 1.000000e+00 : f32
    %174 = vector.broadcast %cst_46 : f32 to vector<1x32xf32>
    %175 = arith.addf %174, %173 : vector<1x32xf32>
    %176 = arith.divf %174, %175 : vector<1x32xf32>
    %177 = vector.extract_strided_slice %164 {offsets = [0, 64], sizes = [1, 32], strides = [1, 1]} : vector<1x128xf32> to vector<1x32xf32>
    %178 = math.tanh %177 : vector<1x32xf32>
    %179 = vector.extract_strided_slice %164 {offsets = [0, 96], sizes = [1, 32], strides = [1, 1]} : vector<1x128xf32> to vector<1x32xf32>
    %180 = arith.negf %179 : vector<1x32xf32>
    %181 = math.exp %180 : vector<1x32xf32>
    %cst_47 = arith.constant 1.000000e+00 : f32
    %182 = vector.broadcast %cst_47 : f32 to vector<1x32xf32>
    %183 = arith.addf %182, %181 : vector<1x32xf32>
    %184 = arith.divf %182, %183 : vector<1x32xf32>
    %185 = arith.mulf %176, %127 : vector<1x32xf32>
    %186 = arith.mulf %170, %178 : vector<1x32xf32>
    %187 = arith.addf %185, %186 : vector<1x32xf32>
    %188 = math.tanh %187 : vector<1x32xf32>
    %189 = arith.mulf %184, %188 : vector<1x32xf32>
    %190 = arith.index_cast %c2_i32 : i32 to index
    %c0_48 = arith.constant 0 : index
    %191 = vector.load %arg14[%190, %c0_48] : memref<8x32xf32, #tpu.memory_space<vmem>>, vector<1x32xf32>
    tpu.vector_store %arg14[%190, %c0_48], %189 {strides = array<i32>} : memref<8x32xf32, #tpu.memory_space<vmem>>, vector<1x32xf32>,
    %c3_i32 = arith.constant 3 : i32
    %192 = arith.index_cast %c3_i32 : i32 to index
    %c0_49 = arith.constant 0 : index
    %193 = vector.load %arg13[%192, %c0_49] : memref<8x128xf32, #tpu.memory_space<vmem>>, vector<1x128xf32>
    %cst_50 = arith.constant dense<0.000000e+00> : vector<1x128xf32>
    %194 = tpu.matmul %160, %7, %cst_50 {dimension_numbers = #tpu.dot_dimension_numbers<[1], [0], [0], [1], [0, 0, 1, 1], [], []>} : vector<1x32xf32>, vector<32x128xf32>, vector<1x128xf32> -> vector<1x128xf32>
    %195 = arith.addf %193, %194 : vector<1x128xf32>
    %196 = vector.extract_strided_slice %195 {offsets = [0, 0], sizes = [1, 32], strides = [1, 1]} : vector<1x128xf32> to vector<1x32xf32>
    %197 = arith.negf %196 : vector<1x32xf32>
    %198 = math.exp %197 : vector<1x32xf32>
    %cst_51 = arith.constant 1.000000e+00 : f32
    %199 = vector.broadcast %cst_51 : f32 to vector<1x32xf32>
    %200 = arith.addf %199, %198 : vector<1x32xf32>
    %201 = arith.divf %199, %200 : vector<1x32xf32>
    %202 = vector.extract_strided_slice %195 {offsets = [0, 32], sizes = [1, 32], strides = [1, 1]} : vector<1x128xf32> to vector<1x32xf32>
    %203 = arith.negf %202 : vector<1x32xf32>
    %204 = math.exp %203 : vector<1x32xf32>
    %cst_52 = arith.constant 1.000000e+00 : f32
    %205 = vector.broadcast %cst_52 : f32 to vector<1x32xf32>
    %206 = arith.addf %205, %204 : vector<1x32xf32>
    %207 = arith.divf %205, %206 : vector<1x32xf32>
    %208 = vector.extract_strided_slice %195 {offsets = [0, 64], sizes = [1, 32], strides = [1, 1]} : vector<1x128xf32> to vector<1x32xf32>
    %209 = math.tanh %208 : vector<1x32xf32>
    %210 = vector.extract_strided_slice %195 {offsets = [0, 96], sizes = [1, 32], strides = [1, 1]} : vector<1x128xf32> to vector<1x32xf32>
    %211 = arith.negf %210 : vector<1x32xf32>
    %212 = math.exp %211 : vector<1x32xf32>
    %cst_53 = arith.constant 1.000000e+00 : f32
    %213 = vector.broadcast %cst_53 : f32 to vector<1x32xf32>
    %214 = arith.addf %213, %212 : vector<1x32xf32>
    %215 = arith.divf %213, %214 : vector<1x32xf32>
    %216 = arith.mulf %207, %158 : vector<1x32xf32>
    %217 = arith.mulf %201, %209 : vector<1x32xf32>
    %218 = arith.addf %216, %217 : vector<1x32xf32>
    %219 = math.tanh %218 : vector<1x32xf32>
    %220 = arith.mulf %215, %219 : vector<1x32xf32>
    %cst_54 = arith.constant dense<0.000000e+00> : vector<1x128xf32>
    %221 = tpu.matmul %220, %8, %cst_54 {dimension_numbers = #tpu.dot_dimension_numbers<[1], [0], [0], [1], [0, 0, 1, 1], [], []>} : vector<1x32xf32>, vector<32x128xf32>, vector<1x128xf32> -> vector<1x128xf32>
    %cst_55 = arith.constant dense<0.000000e+00> : vector<1x128xf32>
    %222 = tpu.matmul %189, %9, %cst_55 {dimension_numbers = #tpu.dot_dimension_numbers<[1], [0], [0], [1], [0, 0, 1, 1], [], []>} : vector<1x32xf32>, vector<32x128xf32>, vector<1x128xf32> -> vector<1x128xf32>
    %223 = arith.addf %221, %222 : vector<1x128xf32>
    %224 = arith.addf %223, %10 : vector<1x128xf32>
    %225 = vector.extract_strided_slice %224 {offsets = [0, 0], sizes = [1, 32], strides = [1, 1]} : vector<1x128xf32> to vector<1x32xf32>
    %226 = arith.negf %225 : vector<1x32xf32>
    %227 = math.exp %226 : vector<1x32xf32>
    %cst_56 = arith.constant 1.000000e+00 : f32
    %228 = vector.broadcast %cst_56 : f32 to vector<1x32xf32>
    %229 = arith.addf %228, %227 : vector<1x32xf32>
    %230 = arith.divf %228, %229 : vector<1x32xf32>
    %231 = vector.extract_strided_slice %224 {offsets = [0, 32], sizes = [1, 32], strides = [1, 1]} : vector<1x128xf32> to vector<1x32xf32>
    %232 = arith.negf %231 : vector<1x32xf32>
    %233 = math.exp %232 : vector<1x32xf32>
    %cst_57 = arith.constant 1.000000e+00 : f32
    %234 = vector.broadcast %cst_57 : f32 to vector<1x32xf32>
    %235 = arith.addf %234, %233 : vector<1x32xf32>
    %236 = arith.divf %234, %235 : vector<1x32xf32>
    %237 = vector.extract_strided_slice %224 {offsets = [0, 64], sizes = [1, 32], strides = [1, 1]} : vector<1x128xf32> to vector<1x32xf32>
    %238 = math.tanh %237 : vector<1x32xf32>
    %239 = vector.extract_strided_slice %224 {offsets = [0, 96], sizes = [1, 32], strides = [1, 1]} : vector<1x128xf32> to vector<1x32xf32>
    %240 = arith.negf %239 : vector<1x32xf32>
    %241 = math.exp %240 : vector<1x32xf32>
    %cst_58 = arith.constant 1.000000e+00 : f32
    %242 = vector.broadcast %cst_58 : f32 to vector<1x32xf32>
    %243 = arith.addf %242, %241 : vector<1x32xf32>
    %244 = arith.divf %242, %243 : vector<1x32xf32>
    %245 = arith.mulf %236, %187 : vector<1x32xf32>
    %246 = arith.mulf %230, %238 : vector<1x32xf32>
    %247 = arith.addf %245, %246 : vector<1x32xf32>
    %248 = math.tanh %247 : vector<1x32xf32>
    %249 = arith.mulf %244, %248 : vector<1x32xf32>
    %250 = arith.index_cast %c3_i32 : i32 to index
    %c0_59 = arith.constant 0 : index
    %251 = vector.load %arg14[%250, %c0_59] : memref<8x32xf32, #tpu.memory_space<vmem>>, vector<1x32xf32>
    tpu.vector_store %arg14[%250, %c0_59], %249 {strides = array<i32>} : memref<8x32xf32, #tpu.memory_space<vmem>>, vector<1x32xf32>,
    %c4_i32 = arith.constant 4 : i32
    %252 = arith.index_cast %c4_i32 : i32 to index
    %c0_60 = arith.constant 0 : index
    %253 = vector.load %arg13[%252, %c0_60] : memref<8x128xf32, #tpu.memory_space<vmem>>, vector<1x128xf32>
    %cst_61 = arith.constant dense<0.000000e+00> : vector<1x128xf32>
    %254 = tpu.matmul %220, %7, %cst_61 {dimension_numbers = #tpu.dot_dimension_numbers<[1], [0], [0], [1], [0, 0, 1, 1], [], []>} : vector<1x32xf32>, vector<32x128xf32>, vector<1x128xf32> -> vector<1x128xf32>
    %255 = arith.addf %253, %254 : vector<1x128xf32>
    %256 = vector.extract_strided_slice %255 {offsets = [0, 0], sizes = [1, 32], strides = [1, 1]} : vector<1x128xf32> to vector<1x32xf32>
    %257 = arith.negf %256 : vector<1x32xf32>
    %258 = math.exp %257 : vector<1x32xf32>
    %cst_62 = arith.constant 1.000000e+00 : f32
    %259 = vector.broadcast %cst_62 : f32 to vector<1x32xf32>
    %260 = arith.addf %259, %258 : vector<1x32xf32>
    %261 = arith.divf %259, %260 : vector<1x32xf32>
    %262 = vector.extract_strided_slice %255 {offsets = [0, 32], sizes = [1, 32], strides = [1, 1]} : vector<1x128xf32> to vector<1x32xf32>
    %263 = arith.negf %262 : vector<1x32xf32>
    %264 = math.exp %263 : vector<1x32xf32>
    %cst_63 = arith.constant 1.000000e+00 : f32
    %265 = vector.broadcast %cst_63 : f32 to vector<1x32xf32>
    %266 = arith.addf %265, %264 : vector<1x32xf32>
    %267 = arith.divf %265, %266 : vector<1x32xf32>
    %268 = vector.extract_strided_slice %255 {offsets = [0, 64], sizes = [1, 32], strides = [1, 1]} : vector<1x128xf32> to vector<1x32xf32>
    %269 = math.tanh %268 : vector<1x32xf32>
    %270 = vector.extract_strided_slice %255 {offsets = [0, 96], sizes = [1, 32], strides = [1, 1]} : vector<1x128xf32> to vector<1x32xf32>
    %271 = arith.negf %270 : vector<1x32xf32>
    %272 = math.exp %271 : vector<1x32xf32>
    %cst_64 = arith.constant 1.000000e+00 : f32
    %273 = vector.broadcast %cst_64 : f32 to vector<1x32xf32>
    %274 = arith.addf %273, %272 : vector<1x32xf32>
    %275 = arith.divf %273, %274 : vector<1x32xf32>
    %276 = arith.mulf %267, %218 : vector<1x32xf32>
    %277 = arith.mulf %261, %269 : vector<1x32xf32>
    %278 = arith.addf %276, %277 : vector<1x32xf32>
    %279 = math.tanh %278 : vector<1x32xf32>
    %280 = arith.mulf %275, %279 : vector<1x32xf32>
    %cst_65 = arith.constant dense<0.000000e+00> : vector<1x128xf32>
    %281 = tpu.matmul %280, %8, %cst_65 {dimension_numbers = #tpu.dot_dimension_numbers<[1], [0], [0], [1], [0, 0, 1, 1], [], []>} : vector<1x32xf32>, vector<32x128xf32>, vector<1x128xf32> -> vector<1x128xf32>
    %cst_66 = arith.constant dense<0.000000e+00> : vector<1x128xf32>
    %282 = tpu.matmul %249, %9, %cst_66 {dimension_numbers = #tpu.dot_dimension_numbers<[1], [0], [0], [1], [0, 0, 1, 1], [], []>} : vector<1x32xf32>, vector<32x128xf32>, vector<1x128xf32> -> vector<1x128xf32>
    %283 = arith.addf %281, %282 : vector<1x128xf32>
    %284 = arith.addf %283, %10 : vector<1x128xf32>
    %285 = vector.extract_strided_slice %284 {offsets = [0, 0], sizes = [1, 32], strides = [1, 1]} : vector<1x128xf32> to vector<1x32xf32>
    %286 = arith.negf %285 : vector<1x32xf32>
    %287 = math.exp %286 : vector<1x32xf32>
    %cst_67 = arith.constant 1.000000e+00 : f32
    %288 = vector.broadcast %cst_67 : f32 to vector<1x32xf32>
    %289 = arith.addf %288, %287 : vector<1x32xf32>
    %290 = arith.divf %288, %289 : vector<1x32xf32>
    %291 = vector.extract_strided_slice %284 {offsets = [0, 32], sizes = [1, 32], strides = [1, 1]} : vector<1x128xf32> to vector<1x32xf32>
    %292 = arith.negf %291 : vector<1x32xf32>
    %293 = math.exp %292 : vector<1x32xf32>
    %cst_68 = arith.constant 1.000000e+00 : f32
    %294 = vector.broadcast %cst_68 : f32 to vector<1x32xf32>
    %295 = arith.addf %294, %293 : vector<1x32xf32>
    %296 = arith.divf %294, %295 : vector<1x32xf32>
    %297 = vector.extract_strided_slice %284 {offsets = [0, 64], sizes = [1, 32], strides = [1, 1]} : vector<1x128xf32> to vector<1x32xf32>
    %298 = math.tanh %297 : vector<1x32xf32>
    %299 = vector.extract_strided_slice %284 {offsets = [0, 96], sizes = [1, 32], strides = [1, 1]} : vector<1x128xf32> to vector<1x32xf32>
    %300 = arith.negf %299 : vector<1x32xf32>
    %301 = math.exp %300 : vector<1x32xf32>
    %cst_69 = arith.constant 1.000000e+00 : f32
    %302 = vector.broadcast %cst_69 : f32 to vector<1x32xf32>
    %303 = arith.addf %302, %301 : vector<1x32xf32>
    %304 = arith.divf %302, %303 : vector<1x32xf32>
    %305 = arith.mulf %296, %247 : vector<1x32xf32>
    %306 = arith.mulf %290, %298 : vector<1x32xf32>
    %307 = arith.addf %305, %306 : vector<1x32xf32>
    %308 = math.tanh %307 : vector<1x32xf32>
    %309 = arith.mulf %304, %308 : vector<1x32xf32>
    %310 = arith.index_cast %c4_i32 : i32 to index
    %c0_70 = arith.constant 0 : index
    %311 = vector.load %arg14[%310, %c0_70] : memref<8x32xf32, #tpu.memory_space<vmem>>, vector<1x32xf32>
    tpu.vector_store %arg14[%310, %c0_70], %309 {strides = array<i32>} : memref<8x32xf32, #tpu.memory_space<vmem>>, vector<1x32xf32>,
    %c5_i32 = arith.constant 5 : i32
    %312 = arith.index_cast %c5_i32 : i32 to index
    %c0_71 = arith.constant 0 : index
    %313 = vector.load %arg13[%312, %c0_71] : memref<8x128xf32, #tpu.memory_space<vmem>>, vector<1x128xf32>
    %cst_72 = arith.constant dense<0.000000e+00> : vector<1x128xf32>
    %314 = tpu.matmul %280, %7, %cst_72 {dimension_numbers = #tpu.dot_dimension_numbers<[1], [0], [0], [1], [0, 0, 1, 1], [], []>} : vector<1x32xf32>, vector<32x128xf32>, vector<1x128xf32> -> vector<1x128xf32>
    %315 = arith.addf %313, %314 : vector<1x128xf32>
    %316 = vector.extract_strided_slice %315 {offsets = [0, 0], sizes = [1, 32], strides = [1, 1]} : vector<1x128xf32> to vector<1x32xf32>
    %317 = arith.negf %316 : vector<1x32xf32>
    %318 = math.exp %317 : vector<1x32xf32>
    %cst_73 = arith.constant 1.000000e+00 : f32
    %319 = vector.broadcast %cst_73 : f32 to vector<1x32xf32>
    %320 = arith.addf %319, %318 : vector<1x32xf32>
    %321 = arith.divf %319, %320 : vector<1x32xf32>
    %322 = vector.extract_strided_slice %315 {offsets = [0, 32], sizes = [1, 32], strides = [1, 1]} : vector<1x128xf32> to vector<1x32xf32>
    %323 = arith.negf %322 : vector<1x32xf32>
    %324 = math.exp %323 : vector<1x32xf32>
    %cst_74 = arith.constant 1.000000e+00 : f32
    %325 = vector.broadcast %cst_74 : f32 to vector<1x32xf32>
    %326 = arith.addf %325, %324 : vector<1x32xf32>
    %327 = arith.divf %325, %326 : vector<1x32xf32>
    %328 = vector.extract_strided_slice %315 {offsets = [0, 64], sizes = [1, 32], strides = [1, 1]} : vector<1x128xf32> to vector<1x32xf32>
    %329 = math.tanh %328 : vector<1x32xf32>
    %330 = vector.extract_strided_slice %315 {offsets = [0, 96], sizes = [1, 32], strides = [1, 1]} : vector<1x128xf32> to vector<1x32xf32>
    %331 = arith.negf %330 : vector<1x32xf32>
    %332 = math.exp %331 : vector<1x32xf32>
    %cst_75 = arith.constant 1.000000e+00 : f32
    %333 = vector.broadcast %cst_75 : f32 to vector<1x32xf32>
    %334 = arith.addf %333, %332 : vector<1x32xf32>
    %335 = arith.divf %333, %334 : vector<1x32xf32>
    %336 = arith.mulf %327, %278 : vector<1x32xf32>
    %337 = arith.mulf %321, %329 : vector<1x32xf32>
    %338 = arith.addf %336, %337 : vector<1x32xf32>
    %339 = math.tanh %338 : vector<1x32xf32>
    %340 = arith.mulf %335, %339 : vector<1x32xf32>
    %cst_76 = arith.constant dense<0.000000e+00> : vector<1x128xf32>
    %341 = tpu.matmul %340, %8, %cst_76 {dimension_numbers = #tpu.dot_dimension_numbers<[1], [0], [0], [1], [0, 0, 1, 1], [], []>} : vector<1x32xf32>, vector<32x128xf32>, vector<1x128xf32> -> vector<1x128xf32>
    %cst_77 = arith.constant dense<0.000000e+00> : vector<1x128xf32>
    %342 = tpu.matmul %309, %9, %cst_77 {dimension_numbers = #tpu.dot_dimension_numbers<[1], [0], [0], [1], [0, 0, 1, 1], [], []>} : vector<1x32xf32>, vector<32x128xf32>, vector<1x128xf32> -> vector<1x128xf32>
    %343 = arith.addf %341, %342 : vector<1x128xf32>
    %344 = arith.addf %343, %10 : vector<1x128xf32>
    %345 = vector.extract_strided_slice %344 {offsets = [0, 0], sizes = [1, 32], strides = [1, 1]} : vector<1x128xf32> to vector<1x32xf32>
    %346 = arith.negf %345 : vector<1x32xf32>
    %347 = math.exp %346 : vector<1x32xf32>
    %cst_78 = arith.constant 1.000000e+00 : f32
    %348 = vector.broadcast %cst_78 : f32 to vector<1x32xf32>
    %349 = arith.addf %348, %347 : vector<1x32xf32>
    %350 = arith.divf %348, %349 : vector<1x32xf32>
    %351 = vector.extract_strided_slice %344 {offsets = [0, 32], sizes = [1, 32], strides = [1, 1]} : vector<1x128xf32> to vector<1x32xf32>
    %352 = arith.negf %351 : vector<1x32xf32>
    %353 = math.exp %352 : vector<1x32xf32>
    %cst_79 = arith.constant 1.000000e+00 : f32
    %354 = vector.broadcast %cst_79 : f32 to vector<1x32xf32>
    %355 = arith.addf %354, %353 : vector<1x32xf32>
    %356 = arith.divf %354, %355 : vector<1x32xf32>
    %357 = vector.extract_strided_slice %344 {offsets = [0, 64], sizes = [1, 32], strides = [1, 1]} : vector<1x128xf32> to vector<1x32xf32>
    %358 = math.tanh %357 : vector<1x32xf32>
    %359 = vector.extract_strided_slice %344 {offsets = [0, 96], sizes = [1, 32], strides = [1, 1]} : vector<1x128xf32> to vector<1x32xf32>
    %360 = arith.negf %359 : vector<1x32xf32>
    %361 = math.exp %360 : vector<1x32xf32>
    %cst_80 = arith.constant 1.000000e+00 : f32
    %362 = vector.broadcast %cst_80 : f32 to vector<1x32xf32>
    %363 = arith.addf %362, %361 : vector<1x32xf32>
    %364 = arith.divf %362, %363 : vector<1x32xf32>
    %365 = arith.mulf %356, %307 : vector<1x32xf32>
    %366 = arith.mulf %350, %358 : vector<1x32xf32>
    %367 = arith.addf %365, %366 : vector<1x32xf32>
    %368 = math.tanh %367 : vector<1x32xf32>
    %369 = arith.mulf %364, %368 : vector<1x32xf32>
    %370 = arith.index_cast %c5_i32 : i32 to index
    %c0_81 = arith.constant 0 : index
    %371 = vector.load %arg14[%370, %c0_81] : memref<8x32xf32, #tpu.memory_space<vmem>>, vector<1x32xf32>
    tpu.vector_store %arg14[%370, %c0_81], %369 {strides = array<i32>} : memref<8x32xf32, #tpu.memory_space<vmem>>, vector<1x32xf32>,
    %c6_i32 = arith.constant 6 : i32
    %372 = arith.index_cast %c6_i32 : i32 to index
    %c0_82 = arith.constant 0 : index
    %373 = vector.load %arg13[%372, %c0_82] : memref<8x128xf32, #tpu.memory_space<vmem>>, vector<1x128xf32>
    %cst_83 = arith.constant dense<0.000000e+00> : vector<1x128xf32>
    %374 = tpu.matmul %340, %7, %cst_83 {dimension_numbers = #tpu.dot_dimension_numbers<[1], [0], [0], [1], [0, 0, 1, 1], [], []>} : vector<1x32xf32>, vector<32x128xf32>, vector<1x128xf32> -> vector<1x128xf32>
    %375 = arith.addf %373, %374 : vector<1x128xf32>
    %376 = vector.extract_strided_slice %375 {offsets = [0, 0], sizes = [1, 32], strides = [1, 1]} : vector<1x128xf32> to vector<1x32xf32>
    %377 = arith.negf %376 : vector<1x32xf32>
    %378 = math.exp %377 : vector<1x32xf32>
    %cst_84 = arith.constant 1.000000e+00 : f32
    %379 = vector.broadcast %cst_84 : f32 to vector<1x32xf32>
    %380 = arith.addf %379, %378 : vector<1x32xf32>
    %381 = arith.divf %379, %380 : vector<1x32xf32>
    %382 = vector.extract_strided_slice %375 {offsets = [0, 32], sizes = [1, 32], strides = [1, 1]} : vector<1x128xf32> to vector<1x32xf32>
    %383 = arith.negf %382 : vector<1x32xf32>
    %384 = math.exp %383 : vector<1x32xf32>
    %cst_85 = arith.constant 1.000000e+00 : f32
    %385 = vector.broadcast %cst_85 : f32 to vector<1x32xf32>
    %386 = arith.addf %385, %384 : vector<1x32xf32>
    %387 = arith.divf %385, %386 : vector<1x32xf32>
    %388 = vector.extract_strided_slice %375 {offsets = [0, 64], sizes = [1, 32], strides = [1, 1]} : vector<1x128xf32> to vector<1x32xf32>
    %389 = math.tanh %388 : vector<1x32xf32>
    %390 = vector.extract_strided_slice %375 {offsets = [0, 96], sizes = [1, 32], strides = [1, 1]} : vector<1x128xf32> to vector<1x32xf32>
    %391 = arith.negf %390 : vector<1x32xf32>
    %392 = math.exp %391 : vector<1x32xf32>
    %cst_86 = arith.constant 1.000000e+00 : f32
    %393 = vector.broadcast %cst_86 : f32 to vector<1x32xf32>
    %394 = arith.addf %393, %392 : vector<1x32xf32>
    %395 = arith.divf %393, %394 : vector<1x32xf32>
    %396 = arith.mulf %387, %338 : vector<1x32xf32>
    %397 = arith.mulf %381, %389 : vector<1x32xf32>
    %398 = arith.addf %396, %397 : vector<1x32xf32>
    %399 = math.tanh %398 : vector<1x32xf32>
    %400 = arith.mulf %395, %399 : vector<1x32xf32>
    %cst_87 = arith.constant dense<0.000000e+00> : vector<1x128xf32>
    %401 = tpu.matmul %400, %8, %cst_87 {dimension_numbers = #tpu.dot_dimension_numbers<[1], [0], [0], [1], [0, 0, 1, 1], [], []>} : vector<1x32xf32>, vector<32x128xf32>, vector<1x128xf32> -> vector<1x128xf32>
    %cst_88 = arith.constant dense<0.000000e+00> : vector<1x128xf32>
    %402 = tpu.matmul %369, %9, %cst_88 {dimension_numbers = #tpu.dot_dimension_numbers<[1], [0], [0], [1], [0, 0, 1, 1], [], []>} : vector<1x32xf32>, vector<32x128xf32>, vector<1x128xf32> -> vector<1x128xf32>
    %403 = arith.addf %401, %402 : vector<1x128xf32>
    %404 = arith.addf %403, %10 : vector<1x128xf32>
    %405 = vector.extract_strided_slice %404 {offsets = [0, 0], sizes = [1, 32], strides = [1, 1]} : vector<1x128xf32> to vector<1x32xf32>
    %406 = arith.negf %405 : vector<1x32xf32>
    %407 = math.exp %406 : vector<1x32xf32>
    %cst_89 = arith.constant 1.000000e+00 : f32
    %408 = vector.broadcast %cst_89 : f32 to vector<1x32xf32>
    %409 = arith.addf %408, %407 : vector<1x32xf32>
    %410 = arith.divf %408, %409 : vector<1x32xf32>
    %411 = vector.extract_strided_slice %404 {offsets = [0, 32], sizes = [1, 32], strides = [1, 1]} : vector<1x128xf32> to vector<1x32xf32>
    %412 = arith.negf %411 : vector<1x32xf32>
    %413 = math.exp %412 : vector<1x32xf32>
    %cst_90 = arith.constant 1.000000e+00 : f32
    %414 = vector.broadcast %cst_90 : f32 to vector<1x32xf32>
    %415 = arith.addf %414, %413 : vector<1x32xf32>
    %416 = arith.divf %414, %415 : vector<1x32xf32>
    %417 = vector.extract_strided_slice %404 {offsets = [0, 64], sizes = [1, 32], strides = [1, 1]} : vector<1x128xf32> to vector<1x32xf32>
    %418 = math.tanh %417 : vector<1x32xf32>
    %419 = vector.extract_strided_slice %404 {offsets = [0, 96], sizes = [1, 32], strides = [1, 1]} : vector<1x128xf32> to vector<1x32xf32>
    %420 = arith.negf %419 : vector<1x32xf32>
    %421 = math.exp %420 : vector<1x32xf32>
    %cst_91 = arith.constant 1.000000e+00 : f32
    %422 = vector.broadcast %cst_91 : f32 to vector<1x32xf32>
    %423 = arith.addf %422, %421 : vector<1x32xf32>
    %424 = arith.divf %422, %423 : vector<1x32xf32>
    %425 = arith.mulf %416, %367 : vector<1x32xf32>
    %426 = arith.mulf %410, %418 : vector<1x32xf32>
    %427 = arith.addf %425, %426 : vector<1x32xf32>
    %428 = math.tanh %427 : vector<1x32xf32>
    %429 = arith.mulf %424, %428 : vector<1x32xf32>
    %430 = arith.index_cast %c6_i32 : i32 to index
    %c0_92 = arith.constant 0 : index
    %431 = vector.load %arg14[%430, %c0_92] : memref<8x32xf32, #tpu.memory_space<vmem>>, vector<1x32xf32>
    tpu.vector_store %arg14[%430, %c0_92], %429 {strides = array<i32>} : memref<8x32xf32, #tpu.memory_space<vmem>>, vector<1x32xf32>,
    %c7_i32 = arith.constant 7 : i32
    %432 = arith.index_cast %c7_i32 : i32 to index
    %c0_93 = arith.constant 0 : index
    %433 = vector.load %arg13[%432, %c0_93] : memref<8x128xf32, #tpu.memory_space<vmem>>, vector<1x128xf32>
    %cst_94 = arith.constant dense<0.000000e+00> : vector<1x128xf32>
    %434 = tpu.matmul %400, %7, %cst_94 {dimension_numbers = #tpu.dot_dimension_numbers<[1], [0], [0], [1], [0, 0, 1, 1], [], []>} : vector<1x32xf32>, vector<32x128xf32>, vector<1x128xf32> -> vector<1x128xf32>
    %435 = arith.addf %433, %434 : vector<1x128xf32>
    %436 = vector.extract_strided_slice %435 {offsets = [0, 0], sizes = [1, 32], strides = [1, 1]} : vector<1x128xf32> to vector<1x32xf32>
    %437 = arith.negf %436 : vector<1x32xf32>
    %438 = math.exp %437 : vector<1x32xf32>
    %cst_95 = arith.constant 1.000000e+00 : f32
    %439 = vector.broadcast %cst_95 : f32 to vector<1x32xf32>
    %440 = arith.addf %439, %438 : vector<1x32xf32>
    %441 = arith.divf %439, %440 : vector<1x32xf32>
    %442 = vector.extract_strided_slice %435 {offsets = [0, 32], sizes = [1, 32], strides = [1, 1]} : vector<1x128xf32> to vector<1x32xf32>
    %443 = arith.negf %442 : vector<1x32xf32>
    %444 = math.exp %443 : vector<1x32xf32>
    %cst_96 = arith.constant 1.000000e+00 : f32
    %445 = vector.broadcast %cst_96 : f32 to vector<1x32xf32>
    %446 = arith.addf %445, %444 : vector<1x32xf32>
    %447 = arith.divf %445, %446 : vector<1x32xf32>
    %448 = vector.extract_strided_slice %435 {offsets = [0, 64], sizes = [1, 32], strides = [1, 1]} : vector<1x128xf32> to vector<1x32xf32>
    %449 = math.tanh %448 : vector<1x32xf32>
    %450 = vector.extract_strided_slice %435 {offsets = [0, 96], sizes = [1, 32], strides = [1, 1]} : vector<1x128xf32> to vector<1x32xf32>
    %451 = arith.negf %450 : vector<1x32xf32>
    %452 = math.exp %451 : vector<1x32xf32>
    %cst_97 = arith.constant 1.000000e+00 : f32
    %453 = vector.broadcast %cst_97 : f32 to vector<1x32xf32>
    %454 = arith.addf %453, %452 : vector<1x32xf32>
    %455 = arith.divf %453, %454 : vector<1x32xf32>
    %456 = arith.mulf %447, %398 : vector<1x32xf32>
    %457 = arith.mulf %441, %449 : vector<1x32xf32>
    %458 = arith.addf %456, %457 : vector<1x32xf32>
    %459 = math.tanh %458 : vector<1x32xf32>
    %460 = arith.mulf %455, %459 : vector<1x32xf32>
    %cst_98 = arith.constant dense<0.000000e+00> : vector<1x128xf32>
    %461 = tpu.matmul %460, %8, %cst_98 {dimension_numbers = #tpu.dot_dimension_numbers<[1], [0], [0], [1], [0, 0, 1, 1], [], []>} : vector<1x32xf32>, vector<32x128xf32>, vector<1x128xf32> -> vector<1x128xf32>
    %cst_99 = arith.constant dense<0.000000e+00> : vector<1x128xf32>
    %462 = tpu.matmul %429, %9, %cst_99 {dimension_numbers = #tpu.dot_dimension_numbers<[1], [0], [0], [1], [0, 0, 1, 1], [], []>} : vector<1x32xf32>, vector<32x128xf32>, vector<1x128xf32> -> vector<1x128xf32>
    %463 = arith.addf %461, %462 : vector<1x128xf32>
    %464 = arith.addf %463, %10 : vector<1x128xf32>
    %465 = vector.extract_strided_slice %464 {offsets = [0, 0], sizes = [1, 32], strides = [1, 1]} : vector<1x128xf32> to vector<1x32xf32>
    %466 = arith.negf %465 : vector<1x32xf32>
    %467 = math.exp %466 : vector<1x32xf32>
    %cst_100 = arith.constant 1.000000e+00 : f32
    %468 = vector.broadcast %cst_100 : f32 to vector<1x32xf32>
    %469 = arith.addf %468, %467 : vector<1x32xf32>
    %470 = arith.divf %468, %469 : vector<1x32xf32>
    %471 = vector.extract_strided_slice %464 {offsets = [0, 32], sizes = [1, 32], strides = [1, 1]} : vector<1x128xf32> to vector<1x32xf32>
    %472 = arith.negf %471 : vector<1x32xf32>
    %473 = math.exp %472 : vector<1x32xf32>
    %cst_101 = arith.constant 1.000000e+00 : f32
    %474 = vector.broadcast %cst_101 : f32 to vector<1x32xf32>
    %475 = arith.addf %474, %473 : vector<1x32xf32>
    %476 = arith.divf %474, %475 : vector<1x32xf32>
    %477 = vector.extract_strided_slice %464 {offsets = [0, 64], sizes = [1, 32], strides = [1, 1]} : vector<1x128xf32> to vector<1x32xf32>
    %478 = math.tanh %477 : vector<1x32xf32>
    %479 = vector.extract_strided_slice %464 {offsets = [0, 96], sizes = [1, 32], strides = [1, 1]} : vector<1x128xf32> to vector<1x32xf32>
    %480 = arith.negf %479 : vector<1x32xf32>
    %481 = math.exp %480 : vector<1x32xf32>
    %cst_102 = arith.constant 1.000000e+00 : f32
    %482 = vector.broadcast %cst_102 : f32 to vector<1x32xf32>
    %483 = arith.addf %482, %481 : vector<1x32xf32>
    %484 = arith.divf %482, %483 : vector<1x32xf32>
    %485 = arith.mulf %476, %427 : vector<1x32xf32>
    %486 = arith.mulf %470, %478 : vector<1x32xf32>
    %487 = arith.addf %485, %486 : vector<1x32xf32>
    %488 = math.tanh %487 : vector<1x32xf32>
    %489 = arith.mulf %484, %488 : vector<1x32xf32>
    %490 = arith.index_cast %c7_i32 : i32 to index
    %c0_103 = arith.constant 0 : index
    %491 = vector.load %arg14[%490, %c0_103] : memref<8x32xf32, #tpu.memory_space<vmem>>, vector<1x32xf32>
    tpu.vector_store %arg14[%490, %c0_103], %489 {strides = array<i32>} : memref<8x32xf32, #tpu.memory_space<vmem>>, vector<1x32xf32>,
    %c8_i32 = arith.constant 8 : i32
    %c0_104 = arith.constant 0 : index
    %c0_105 = arith.constant 0 : index
    %492 = vector.load %arg14[%c0_104, %c0_105] : memref<8x32xf32, #tpu.memory_space<vmem>>, vector<8x32xf32>
    %c0_106 = arith.constant 0 : index
    %c0_107 = arith.constant 0 : index
    %493 = vector.load %arg8[%c0_106, %c0_107] : memref<32x32xf32, #tpu.memory_space<vmem>>, vector<32x32xf32>
    %cst_108 = arith.constant dense<0.000000e+00> : vector<8x32xf32>
    %494 = tpu.matmul %492, %493, %cst_108 {dimension_numbers = #tpu.dot_dimension_numbers<[1], [0], [0], [1], [0, 0, 1, 1], [], []>} : vector<8x32xf32>, vector<32x32xf32>, vector<8x32xf32> -> vector<8x32xf32>
    %c0_109 = arith.constant 0 : index
    %c0_110 = arith.constant 0 : index
    %495 = vector.load %arg9[%c0_109, %c0_110] : memref<1x32xf32, #tpu.memory_space<vmem>>, vector<1x32xf32>
    %496 = vector.broadcast %495 : vector<1x32xf32> to vector<8x32xf32>
    %497 = arith.addf %494, %496 : vector<8x32xf32>
    %498 = math.tanh %497 : vector<8x32xf32>
    %c0_111 = arith.constant 0 : index
    %c0_112 = arith.constant 0 : index
    %499 = vector.load %arg10[%c0_111, %c0_112] : memref<32x1xf32, #tpu.memory_space<vmem>>, vector<32x1xf32>
    %cst_113 = arith.constant dense<0.000000e+00> : vector<8x1xf32>
    %500 = tpu.matmul %498, %499, %cst_113 {dimension_numbers = #tpu.dot_dimension_numbers<[1], [0], [0], [1], [0, 0, 1, 1], [], []>} : vector<8x32xf32>, vector<32x1xf32>, vector<8x1xf32> -> vector<8x1xf32>
    %c0_114 = arith.constant 0 : index
    %c0_115 = arith.constant 0 : index
    %501 = vector.load %arg11[%c0_114, %c0_115] : memref<1x1xf32, #tpu.memory_space<vmem>>, vector<1x1xf32>
    %502 = vector.broadcast %501 : vector<1x1xf32> to vector<8x1xf32>
    %503 = arith.addf %500, %502 : vector<8x1xf32>
    %c0_116 = arith.constant 0 : index
    %c0_117 = arith.constant 0 : index
    %504 = vector.load %arg12[%c0_116, %c0_117] : memref<8x1xf32, #tpu.memory_space<vmem>>, vector<8x1xf32>
    tpu.vector_store %arg12[%c0_116, %c0_117], %503 {strides = array<i32>} : memref<8x1xf32, #tpu.memory_space<vmem>>, vector<8x1xf32>,
    return
  }
  func.func @transform_0(%arg0: i32) -> (i32, i32) {
    %c0_i32 = arith.constant 0 : i32
    %c0_i32_0 = arith.constant 0 : i32
    %c0_i32_1 = arith.constant 0 : i32
    return %c0_i32, %c0_i32_0 : i32, i32
  }
  func.func @transform_1(%arg0: i32) -> (i32, i32) {
    %c0_i32 = arith.constant 0 : i32
    %c0_i32_0 = arith.constant 0 : i32
    %c0_i32_1 = arith.constant 0 : i32
    return %c0_i32, %c0_i32_0 : i32, i32
  }
  func.func @transform_2(%arg0: i32) -> (i32, i32) {
    %c0_i32 = arith.constant 0 : i32
    %c0_i32_0 = arith.constant 0 : i32
    %c0_i32_1 = arith.constant 0 : i32
    return %c0_i32, %c0_i32_0 : i32, i32
  }
  func.func @transform_3(%arg0: i32) -> (i32, i32) {
    %c0_i32 = arith.constant 0 : i32
    %c0_i32_0 = arith.constant 0 : i32
    %c0_i32_1 = arith.constant 0 : i32
    return %c0_i32, %c0_i32_0 : i32, i32
  }
  func.func @transform_4(%arg0: i32) -> (i32, i32) {
    %c0_i32 = arith.constant 0 : i32
    %c0_i32_0 = arith.constant 0 : i32
    %c0_i32_1 = arith.constant 0 : i32
    return %c0_i32, %c0_i32_0 : i32, i32
  }
  func.func @transform_5(%arg0: i32) -> (i32, i32) {
    %c0_i32 = arith.constant 0 : i32
    %c0_i32_0 = arith.constant 0 : i32
    %c0_i32_1 = arith.constant 0 : i32
    return %c0_i32, %c0_i32_0 : i32, i32
  }
  func.func @transform_6(%arg0: i32) -> (i32, i32) {
    %c0_i32 = arith.constant 0 : i32
    %c0_i32_0 = arith.constant 0 : i32
    %c0_i32_1 = arith.constant 0 : i32
    return %c0_i32, %c0_i32_0 : i32, i32
  }
  func.func @transform_7(%arg0: i32) -> (i32, i32) {
    %c0_i32 = arith.constant 0 : i32
    %c0_i32_0 = arith.constant 0 : i32
    %c0_i32_1 = arith.constant 0 : i32
    return %c0_i32, %c0_i32_0 : i32, i32
  }
  func.func @transform_8(%arg0: i32) -> (i32, i32) {
    %c0_i32 = arith.constant 0 : i32
    %c0_i32_0 = arith.constant 0 : i32
    %c0_i32_1 = arith.constant 0 : i32
    return %c0_i32, %c0_i32_0 : i32, i32
  }
  func.func @transform_9(%arg0: i32) -> (i32, i32) {
    %c0_i32 = arith.constant 0 : i32
    %c0_i32_0 = arith.constant 0 : i32
    %c0_i32_1 = arith.constant 0 : i32
    return %c0_i32, %c0_i32_0 : i32, i32
  }
  func.func @transform_10(%arg0: i32) -> (i32, i32) {
    %c0_i32 = arith.constant 0 : i32
    %c0_i32_0 = arith.constant 0 : i32
    %c0_i32_1 = arith.constant 0 : i32
    return %c0_i32, %c0_i32_0 : i32, i32
  }
  func.func @transform_11(%arg0: i32) -> (i32, i32) {
    %c0_i32 = arith.constant 0 : i32
    %c0_i32_0 = arith.constant 0 : i32
    %c0_i32_1 = arith.constant 0 : i32
    return %c0_i32, %c0_i32_0 : i32, i32
  }
}

</mosaic_0001>

<llo_original>
// kernel: steering_forward.1
$region0: #{steering_forward.1}
  #allocation0 [shape = 'u32[]', space=smem, size = 0x4, offset = 0x4, fixed_abs, tag = 'smem constant byte address 0x4 - core index']
  #allocation1 [shape = 'u32[72,128]{1,0:T(1,128)}', space=vmem, size = 0x9000, scoped, tag = 'internal scratch']
  #allocation2 [shape = 'f32[8,128]{1,0:T(8,128)}', space=vmem, size = 0x1000, scoped, tag = 'scratch operand']
  #allocation3 [shape = 'f32[8,32]{1,0:T(8,128)}', space=vmem, size = 0x1000, scoped, tag = 'scratch operand']
  #allocation4 [shape = 'f32[1,1]{1,0:T(1,128)S(1)}', space=vmem, size = 0x200, scoped, tag = 'scoped memory for steering_forward.1']
  %s0 = inlined_call_operand.hbm [shape: f32[8,16], index: 0, kind: input, shape index: {}]
  %s1 = inlined_call_operand.hbm [shape: f32[16,128], index: 1, kind: input, shape index: {}]
  %s2 = inlined_call_operand.vmem [shape: f32[32,128], index: 2, kind: input, shape index: {}]
  %s3 = inlined_call_operand.vmem [shape: f32[1,128], index: 3, kind: input, shape index: {}]
  %s4 = inlined_call_operand.hbm [shape: f32[32,128], index: 4, kind: input, shape index: {}]
  %s5 = inlined_call_operand.hbm [shape: f32[32,128], index: 5, kind: input, shape index: {}]
  %s6 = inlined_call_operand.vmem [shape: f32[1,128], index: 6, kind: input, shape index: {}]
  %s7 = inlined_call_operand.hbm [shape: f32[32,32], index: 7, kind: input, shape index: {}]
  %s8 = inlined_call_operand.vmem [shape: f32[1,32], index: 8, kind: input, shape index: {}]
  %s9 = inlined_call_operand.vmem [shape: f32[32,1], index: 9, kind: input, shape index: {}]
  %s10 = inlined_call_operand.<no memory space> [shape: f32[1,1], index: 10, kind: input, shape index: {}]
  %s11 = inlined_call_operand.vmem [shape: f32[8,1], index: 11, kind: output, shape index: {}]
  %s12 = sld [smem:[#allocation0]]
  $region74: #{steering_forward.1} parent=0
    _
  %s14 = ssub.s32 1, %s12
  %s15 = scalar_select 0, %s14, %s12
  %v16 = vstv %s10
  %17 = vst [vmem:[#allocation4] sm:$0x1] %v16
  $region1: #{steering_forward.1} parent=0
    #allocation5 [shape = 'u8[4096]{0}', space=vmem, size = 0x1000, scoped, tag = 'input window, operand 0, single buffered']
    #allocation6 [shape = 's32[1]{0}', space=sflag, size = 0x4, scoped, tag = 'scoped memory for steering_forward.1']
    #allocation7 [shape = 'u8[8192]{0}', space=vmem, size = 0x2000, scoped, tag = 'input window, operand 1, single buffered']
    #allocation8 [shape = 's32[1]{0}', space=sflag, size = 0x4, scoped, tag = 'scoped memory for steering_forward.1']
    #allocation9 [shape = 'u8[16384]{0}', space=vmem, size = 0x4000, scoped, tag = 'input window, operand 4, single buffered']
    #allocation10 [shape = 'u8[16384]{0}', space=vmem, size = 0x4000, scoped, tag = 'input window, operand 5, single buffered']
    #allocation11 [shape = 's32[1]{0}', space=sflag, size = 0x4, scoped, tag = 'scoped memory for steering_forward.1']
    #allocation12 [shape = 'u8[16384]{0}', space=vmem, size = 0x4000, scoped, tag = 'input window, operand 7, single buffered']
    %18 = vsyncpa [#allocation6], 0
    %19 = vsyncpa [#allocation8], 0
    %20 = vsyncpa [#allocation11], 0
    // Predicated region
    $region2: #{steering_forward.1} parent=1 // pred_check
      _
    $region3: #{steering_forward.1} parent=1 // pred_check_branch
      %22 = sbr.rel (0) target = $region5
    $region4: #{steering_forward.1} parent=1 // pred_region
      %24 = vsyncadd [#allocation6], 0
      %s26 = sshll.u32 %s0, 4
      %s27 = int_to_ptr.hbm [resolvable:$true] %s26
      %s28 = sshll.u32 [#allocation5], 4
      %s29 = int_to_ptr.vmem [resolvable:$true] %s28
      %31 = dma.hbm_to_vmem [thread:$0]  %s27, 128, %s29, [#allocation6]
    $region5: #{steering_forward.1} parent=1 // pred_fallthru
      _
    // Predicated region
    $region6: #{steering_forward.1} parent=1 // pred_check
      _
    $region7: #{steering_forward.1} parent=1 // pred_check_branch
      %33 = sbr.rel (0) target = $region9
    $region8: #{steering_forward.1} parent=1 // pred_region
      %35 = vsyncadd [#allocation8], 0
      %s36 = sshll.u32 %s1, 4
      %s37 = int_to_ptr.hbm [resolvable:$true] %s36
      %s38 = sshll.u32 [#allocation7], 4
      %s39 = int_to_ptr.vmem [resolvable:$true] %s38
      %44 = dma.hbm_to_vmem [thread:$0]  %s37, 256, %s39, [#allocation8], 128, 128, 8
    $region9: #{steering_forward.1} parent=1 // pred_fallthru
      _
    // Predicated region
    $region10: #{steering_forward.1} parent=1 // pred_check
      _
    $region11: #{steering_forward.1} parent=1 // pred_check_branch
      %46 = sbr.rel (0) target = $region13
    $region12: #{steering_forward.1} parent=1 // pred_region
      _
    $region13: #{steering_forward.1} parent=1 // pred_fallthru
      _
    // Predicated region
    $region14: #{steering_forward.1} parent=1 // pred_check
      _
    $region15: #{steering_forward.1} parent=1 // pred_check_branch
      %48 = sbr.rel (0) target = $region17
    $region16: #{steering_forward.1} parent=1 // pred_region
      _
    $region17: #{steering_forward.1} parent=1 // pred_fallthru
      _
    // Predicated region
    $region18: #{steering_forward.1} parent=1 // pred_check
      _
    $region19: #{steering_forward.1} parent=1 // pred_check_branch
      %50 = sbr.rel (0) target = $region21
    $region20: #{steering_forward.1} parent=1 // pred_region
      %52 = vsyncadd [#allocation8], 0
      %s53 = sshll.u32 %s4, 4
      %s54 = int_to_ptr.hbm [resolvable:$true] %s53
      %s55 = sshll.u32 [#allocation9], 4
      %s56 = int_to_ptr.vmem [resolvable:$true] %s55
      %61 = dma.hbm_to_vmem [thread:$0]  %s54, 512, %s56, [#allocation8], 128, 128, 8
    $region21: #{steering_forward.1} parent=1 // pred_fallthru
      _
    // Predicated region
    $region22: #{steering_forward.1} parent=1 // pred_check
      _
    $region23: #{steering_forward.1} parent=1 // pred_check_branch
      %63 = sbr.rel (0) target = $region25
    $region24: #{steering_forward.1} parent=1 // pred_region
      %65 = vsyncadd [#allocation11], 0
      %s66 = sshll.u32 %s5, 4
      %s67 = int_to_ptr.hbm [resolvable:$true] %s66
      %s68 = sshll.u32 [#allocation10], 4
      %s69 = int_to_ptr.vmem [resolvable:$true] %s68
      %74 = dma.hbm_to_vmem [thread:$0]  %s67, 512, %s69, [#allocation11], 128, 128, 8
    $region25: #{steering_forward.1} parent=1 // pred_fallthru
      _
    // Predicated region
    $region26: #{steering_forward.1} parent=1 // pred_check
      _
    $region27: #{steering_forward.1} parent=1 // pred_check_branch
      %76 = sbr.rel (0) target = $region29
    $region28: #{steering_forward.1} parent=1 // pred_region
      _
    $region29: #{steering_forward.1} parent=1 // pred_fallthru
      _
    // Predicated region
    $region30: #{steering_forward.1} parent=1 // pred_check
      _
    $region31: #{steering_forward.1} parent=1 // pred_check_branch
      %78 = sbr.rel (0) target = $region33
    $region32: #{steering_forward.1} parent=1 // pred_region
      %80 = vsyncadd [#allocation11], 0
      %s81 = sshll.u32 %s7, 4
      %s82 = int_to_ptr.hbm [resolvable:$true] %s81
      %s83 = sshll.u32 [#allocation12], 4
      %s84 = int_to_ptr.vmem [resolvable:$true] %s83
      %89 = dma.hbm_to_vmem [thread:$0]  %s82, 512, %s84, [#allocation11], 128, 128, 8
    $region33: #{steering_forward.1} parent=1 // pred_fallthru
      _
    // Predicated region
    $region34: #{steering_forward.1} parent=1 // pred_check
      _
    $region35: #{steering_forward.1} parent=1 // pred_check_branch
      %91 = sbr.rel (0) target = $region37
    $region36: #{steering_forward.1} parent=1 // pred_region
      _
    $region37: #{steering_forward.1} parent=1 // pred_fallthru
      _
    // Predicated region
    $region38: #{steering_forward.1} parent=1 // pred_check
      _
    $region39: #{steering_forward.1} parent=1 // pred_check_branch
      %93 = sbr.rel (0) target = $region41
    $region40: #{steering_forward.1} parent=1 // pred_region
      _
    $region41: #{steering_forward.1} parent=1 // pred_fallthru
      _
    // Predicated region
    $region42: #{steering_forward.1} parent=1 // pred_check
      _
    $region43: #{steering_forward.1} parent=1 // pred_check_branch
      %95 = sbr.rel (0) target = $region45
    $region44: #{steering_forward.1} parent=1 // pred_region
      _
    $region45: #{steering_forward.1} parent=1 // pred_fallthru
      _
    // Predicated region
    $region46: #{steering_forward.1} parent=1 // pred_check
      _
    $region47: #{steering_forward.1} parent=1 // pred_check_branch
      %97 = sbr.rel (0) target = $region49
    $region48: #{steering_forward.1} parent=1 // pred_region
      %99 = dma.done [#allocation6], 128
    $region49: #{steering_forward.1} parent=1 // pred_fallthru
      _
    // Predicated region
    $region50: #{steering_forward.1} parent=1 // pred_check
      _
    $region51: #{steering_forward.1} parent=1 // pred_check_branch
      %101 = sbr.rel (0) target = $region53
    $region52: #{steering_forward.1} parent=1 // pred_region
      %103 = dma.done [#allocation8], 256
    $region53: #{steering_forward.1} parent=1 // pred_fallthru
      _
    // Predicated region
    $region54: #{steering_forward.1} parent=1 // pred_check
      _
    $region55: #{steering_forward.1} parent=1 // pred_check_branch
      %105 = sbr.rel (0) target = $region57
    $region56: #{steering_forward.1} parent=1 // pred_region
      %107 = dma.done [#allocation8], 512
    $region57: #{steering_forward.1} parent=1 // pred_fallthru
      _
    // Predicated region
    $region58: #{steering_forward.1} parent=1 // pred_check
      _
    $region59: #{steering_forward.1} parent=1 // pred_check_branch
      %109 = sbr.rel (0) target = $region61
    $region60: #{steering_forward.1} parent=1 // pred_region
      %111 = dma.done [#allocation11], 512
    $region61: #{steering_forward.1} parent=1 // pred_fallthru
      _
    // Predicated region
    $region62: #{steering_forward.1} parent=1 // pred_check
      _
    $region63: #{steering_forward.1} parent=1 // pred_check_branch
      %113 = sbr.rel (0) target = $region65
    $region64: #{steering_forward.1} parent=1 // pred_region
      %115 = dma.done [#allocation11], 512
    $region65: #{steering_forward.1} parent=1 // pred_fallthru
      _
    %v116 = vld [vmem:[#allocation5] sm:$0xff]
    %v117 = vld [vmem:[#allocation7] sm:$0xff]
    %v118 = vld [vmem:[#allocation7 + $0x8] sm:$0xff]
    %v119 = vld [vmem:[%s3] sm:$0x1]
    %v121 = vperm.slane %v119, 0
    %vm123 = vcmask 130048
    %v125 = vsel %vm123, %v116, 0
    %127 = vmatpush.msra.mxu0 0.0
    %128 = vmatpush.msra.mxu0 0.0
    %129 = vmatpush.msra.mxu0 0.0
    %130 = vmatpush.msra.mxu0 0.0
    %131 = vmatpush.msra.mxu0 0.0
    %132 = vmatpush.msra.mxu0 0.0
    %133 = vmatpush.msra.mxu0 0.0
    %134 = vmatpush.msra.mxu0 0.0
    %135 = vmatpush.msra.mxu0 0.0
    %136 = vmatpush.msra.mxu0 0.0
    %137 = vmatpush.msra.mxu0 0.0
    %138 = vmatpush.msra.mxu0 0.0
    %139 = vmatpush.msra.mxu0 0.0
    %140 = vmatpush.msra.mxu0 0.0
    %141 = vmatpush.msra.mxu0 %v118
    %142 = vmatpush.msra.mxu0 %v117
    %143 = vmatmul.f32.gmra.mxu0 %v125
    %v144 = vpop.f32.mrf.mxu0
    %v145 = vadd.f32 %v121, %v144
    %146 = vdwg.mxu0
    %147 = vst [vmem:[#allocation2] sm:$0xff] %v145
    %v148 = vld [vmem:[%s2] sm:$0xff]
    %v149 = vld [vmem:[%s2 + $0x8] sm:$0xff]
    %v150 = vld [vmem:[%s2 + $0x10] sm:$0xff]
    %v151 = vld [vmem:[%s2 + $0x18] sm:$0xff]
    %v152 = vld [vmem:[#allocation9] sm:$0xff]
    %v153 = vld [vmem:[#allocation9 + $0x8] sm:$0xff]
    %v154 = vld [vmem:[#allocation9 + $0x10] sm:$0xff]
    %v155 = vld [vmem:[#allocation9 + $0x18] sm:$0xff]
    %v156 = vld [vmem:[#allocation10] sm:$0xff]
    %v157 = vld [vmem:[#allocation10 + $0x8] sm:$0xff]
    %v158 = vld [vmem:[#allocation10 + $0x10] sm:$0xff]
    %v159 = vld [vmem:[#allocation10 + $0x18] sm:$0xff]
    %v160 = vld [vmem:[%s6] sm:$0x1]
    %v161 = vld [vmem:[#allocation2] sm:$0x1]
    %vm162 = vcmask 261120
    %v164 = vsel %vm162, 0.0, 0
    %166 = vmatpush.msra.mxu0 0.0
    %167 = vmatpush.msra.mxu0 0.0
    %168 = vmatpush.msra.mxu0 0.0
    %169 = vmatpush.msra.mxu0 0.0
    %170 = vmatpush.msra.mxu0 0.0
    %171 = vmatpush.msra.mxu0 0.0
    %172 = vmatpush.msra.mxu0 0.0
    %173 = vmatpush.msra.mxu0 0.0
    %174 = vmatpush.msra.mxu0 0.0
    %175 = vmatpush.msra.mxu0 0.0
    %176 = vmatpush.msra.mxu0 0.0
    %177 = vmatpush.msra.mxu0 0.0
    %178 = vmatpush.msra.mxu0 %v151
    %179 = vmatpush.msra.mxu0 %v150
    %180 = vmatpush.msra.mxu0 %v149
    %181 = vmatpush.msra.mxu0 %v148
    %182 = vmatmul.f32.gmra.mxu0 %v164
    %v183 = vpop.f32.mrf.mxu0
    %v184 = vadd.f32 0.0, %v183
    %185 = vdwg.mxu0
    %v186 = vadd.f32 %v161, %v184
    %v187 = vxor.u32 %v186, 2147483648
    %v188 = vmul.f32 %v187, 1.442695
    %v189 = vpow.pop %v188
    %v190 = vadd.f32 %v189, 1.0
    %v191 = vrcp.pop %v190
    %v192 = vmul.f32 %v190, %v191
    %v193 = vsub.f32 1.0, %v192
    %v194 = vmul.f32 %v191, %v193
    %v195 = vadd.f32 %v191, %v194
    %vm196 = vweird.f32 %v190
    %vm197 = vweird.f32 %v191
    %vm198 = vmor %vm196, %vm197
    %v199 = vsel %vm198, %v191, %v195
    %v200 = vand.u32 2147483647, %v190
    %vm201 = vcmp.eq.f32.partialorder %v200, 8.507059e+37
    %v202 = vand.u32 %v190, 2147483648
    %v203 = vor.u32 1.1754944e-38, %v202
    %v204 = vsel %vm201, %v203, %v199
    %v205 = vmul.f32 1.0, %v204
    %v206 = vtanh.pop %v186
    %v207 = vmul.f32 %v205, 0.0
    %209 = vrot.lane.b32.xlu0 %v206, 64
    %v210 = vpop.permute.xlu0 %209
    %v212 = vmul.f32 %v205, %v210
    %214 = vrot.lane.b32.xlu0 %v212, 32
    %v215 = vpop.permute.xlu0 %214
    %v217 = vadd.f32 %v207, %v215
    %v218 = vtanh.pop %v217
    %220 = vrot.lane.b32.xlu0 %v218, 64
    %v221 = vpop.permute.xlu0 %220
    %v223 = vmul.f32 %v205, %v221
    %224 = vmatpush.msra.mxu0 0.0
    %225 = vmatpush.msra.mxu0 0.0
    %226 = vmatpush.msra.mxu0 0.0
    %227 = vmatpush.msra.mxu0 0.0
    %228 = vmatpush.msra.mxu0 0.0
    %229 = vmatpush.msra.mxu0 0.0
    %230 = vmatpush.msra.mxu0 0.0
    %231 = vmatpush.msra.mxu0 0.0
    %232 = vmatpush.msra.mxu0 0.0
    %233 = vmatpush.msra.mxu0 0.0
    %234 = vmatpush.msra.mxu0 0.0
    %235 = vmatpush.msra.mxu0 0.0
    %236 = vmatpush.msra.mxu0 %v159
    %237 = vmatpush.msra.mxu0 %v158
    %238 = vmatpush.msra.mxu0 %v157
    %239 = vmatpush.msra.mxu0 %v156
    %240 = vmatmul.f32.gmra.mxu0 %v164
    %v241 = vpop.f32.mrf.mxu0
    %v242 = vadd.f32 0.0, %v241
    %243 = vdwg.mxu0
    %245 = vrot.lane.b32.xlu0 %v223, 32
    %v246 = vpop.permute.xlu0 %245
    %v247 = vsel %vm162, %v246, 0
    %249 = vmatpush.msra.mxu0 0.0
    %250 = vmatpush.msra.mxu0 0.0
    %251 = vmatpush.msra.mxu0 0.0
    %252 = vmatpush.msra.mxu0 0.0
    %253 = vmatpush.msra.mxu0 0.0
    %254 = vmatpush.msra.mxu0 0.0
    %255 = vmatpush.msra.mxu0 0.0
    %256 = vmatpush.msra.mxu0 0.0
    %257 = vmatpush.msra.mxu0 0.0
    %258 = vmatpush.msra.mxu0 0.0
    %259 = vmatpush.msra.mxu0 0.0
    %260 = vmatpush.msra.mxu0 0.0
    %261 = vmatpush.msra.mxu0 %v155
    %262 = vmatpush.msra.mxu0 %v154
    %263 = vmatpush.msra.mxu0 %v153
    %264 = vmatpush.msra.mxu0 %v152
    %265 = vmatmul.f32.gmra.mxu0 %v247
    %v266 = vpop.f32.mrf.mxu0
    %v267 = vadd.f32 %v242, %v266
    %268 = vdwg.mxu0
    %v269 = vadd.f32 %v267, %v160
    %v270 = vxor.u32 %v269, 2147483648
    %v271 = vmul.f32 %v270, 1.442695
    %v272 = vpow.pop %v271
    %v273 = vadd.f32 %v272, 1.0
    %v274 = vrcp.pop %v273
    %v275 = vmul.f32 %v273, %v274
    %v276 = vsub.f32 1.0, %v275
    %v277 = vmul.f32 %v274, %v276
    %v278 = vadd.f32 %v274, %v277
    %vm279 = vweird.f32 %v273
    %vm280 = vweird.f32 %v274
    %vm281 = vmor %vm279, %vm280
    %v282 = vsel %vm281, %v274, %v278
    %v283 = vand.u32 2147483647, %v273
    %vm284 = vcmp.eq.f32.partialorder %v283, 8.507059e+37
    %v285 = vand.u32 %v273, 2147483648
    %v286 = vor.u32 1.1754944e-38, %v285
    %v287 = vsel %vm284, %v286, %v282
    %v288 = vmul.f32 1.0, %v287
    %v289 = vtanh.pop %v269
    %v290 = vmul.f32 %v288, 0.0
    %292 = vrot.lane.b32.xlu0 %v289, 64
    %v293 = vpop.permute.xlu0 %292
    %v295 = vmul.f32 %v288, %v293
    %297 = vrot.lane.b32.xlu0 %v295, 32
    %v298 = vpop.permute.xlu0 %297
    %v300 = vadd.f32 %v290, %v298
    %v301 = vtanh.pop %v300
    %303 = vrot.lane.b32.xlu0 %v301, 64
    %v304 = vpop.permute.xlu0 %303
    %v306 = vmul.f32 %v288, %v304
    %308 = vrot.lane.b32.xlu0 %v306, 32
    %v309 = vpop.permute.xlu0 %308
    %vm311 = vcmask 253952
    %312 = vst.msk [vmem:[#allocation3] sm:$0x1] %vm311, %v309
    %v313 = vld [vmem:[#allocation2 + $0x1] sm:$0x1]
    %314 = vmatpush.msra.mxu0 0.0
    %315 = vmatpush.msra.mxu0 0.0
    %316 = vmatpush.msra.mxu0 0.0
    %317 = vmatpush.msra.mxu0 0.0
    %318 = vmatpush.msra.mxu0 0.0
    %319 = vmatpush.msra.mxu0 0.0
    %320 = vmatpush.msra.mxu0 0.0
    %321 = vmatpush.msra.mxu0 0.0
    %322 = vmatpush.msra.mxu0 0.0
    %323 = vmatpush.msra.mxu0 0.0
    %324 = vmatpush.msra.mxu0 0.0
    %325 = vmatpush.msra.mxu0 0.0
    %326 = vmatpush.msra.mxu0 %v151
    %327 = vmatpush.msra.mxu0 %v150
    %328 = vmatpush.msra.mxu0 %v149
    %329 = vmatpush.msra.mxu0 %v148
    %330 = vmatmul.f32.gmra.mxu0 %v247
    %v331 = vpop.f32.mrf.mxu0
    %v332 = vadd.f32 0.0, %v331
    %333 = vdwg.mxu0
    %v334 = vadd.f32 %v313, %v332
    %v335 = vxor.u32 %v334, 2147483648
    %v336 = vmul.f32 %v335, 1.442695
    %v337 = vpow.pop %v336
    %v338 = vadd.f32 %v337, 1.0
    %v339 = vrcp.pop %v338
    %v340 = vmul.f32 %v338, %v339
    %v341 = vsub.f32 1.0, %v340
    %v342 = vmul.f32 %v339, %v341
    %v343 = vadd.f32 %v339, %v342
    %vm344 = vweird.f32 %v338
    %vm345 = vweird.f32 %v339
    %vm346 = vmor %vm344, %vm345
    %v347 = vsel %vm346, %v339, %v343
    %v348 = vand.u32 2147483647, %v338
    %vm349 = vcmp.eq.f32.partialorder %v348, 8.507059e+37
    %v350 = vand.u32 %v338, 2147483648
    %v351 = vor.u32 1.1754944e-38, %v350
    %v352 = vsel %vm349, %v351, %v347
    %v353 = vmul.f32 1.0, %v352
    %v354 = vtanh.pop %v334
    %v355 = vmul.f32 %v353, %v217
    %357 = vrot.lane.b32.xlu0 %v354, 64
    %v358 = vpop.permute.xlu0 %357
    %v360 = vmul.f32 %v353, %v358
    %362 = vrot.lane.b32.xlu0 %v360, 32
    %v363 = vpop.permute.xlu0 %362
    %v365 = vadd.f32 %v355, %v363
    %v366 = vtanh.pop %v365
    %368 = vrot.lane.b32.xlu0 %v366, 64
    %v369 = vpop.permute.xlu0 %368
    %v371 = vmul.f32 %v353, %v369
    %v372 = vsel %vm162, %v309, 0
    %374 = vmatpush.msra.mxu0 0.0
    %375 = vmatpush.msra.mxu0 0.0
    %376 = vmatpush.msra.mxu0 0.0
    %377 = vmatpush.msra.mxu0 0.0
    %378 = vmatpush.msra.mxu0 0.0
    %379 = vmatpush.msra.mxu0 0.0
    %380 = vmatpush.msra.mxu0 0.0
    %381 = vmatpush.msra.mxu0 0.0
    %382 = vmatpush.msra.mxu0 0.0
    %383 = vmatpush.msra.mxu0 0.0
    %384 = vmatpush.msra.mxu0 0.0
    %385 = vmatpush.msra.mxu0 0.0
    %386 = vmatpush.msra.mxu0 %v159
    %387 = vmatpush.msra.mxu0 %v158
    %388 = vmatpush.msra.mxu0 %v157
    %389 = vmatpush.msra.mxu0 %v156
    %390 = vmatmul.f32.gmra.mxu0 %v372
    %v391 = vpop.f32.mrf.mxu0
    %v392 = vadd.f32 0.0, %v391
    %393 = vdwg.mxu0
    %395 = vrot.lane.b32.xlu0 %v371, 32
    %v396 = vpop.permute.xlu0 %395
    %v397 = vsel %vm162, %v396, 0
    %399 = vmatpush.msra.mxu0 0.0
    %400 = vmatpush.msra.mxu0 0.0
    %401 = vmatpush.msra.mxu0 0.0
    %402 = vmatpush.msra.mxu0 0.0
    %403 = vmatpush.msra.mxu0 0.0
    %404 = vmatpush.msra.mxu0 0.0
    %405 = vmatpush.msra.mxu0 0.0
    %406 = vmatpush.msra.mxu0 0.0
    %407 = vmatpush.msra.mxu0 0.0
    %408 = vmatpush.msra.mxu0 0.0
    %409 = vmatpush.msra.mxu0 0.0
    %410 = vmatpush.msra.mxu0 0.0
    %411 = vmatpush.msra.mxu0 %v155
    %412 = vmatpush.msra.mxu0 %v154
    %413 = vmatpush.msra.mxu0 %v153
    %414 = vmatpush.msra.mxu0 %v152
    %415 = vmatmul.f32.gmra.mxu0 %v397
    %v416 = vpop.f32.mrf.mxu0
    %v417 = vadd.f32 %v392, %v416
    %418 = vdwg.mxu0
    %v419 = vadd.f32 %v417, %v160
    %v420 = vxor.u32 %v419, 2147483648
    %v421 = vmul.f32 %v420, 1.442695
    %v422 = vpow.pop %v421
    %v423 = vadd.f32 %v422, 1.0
    %v424 = vrcp.pop %v423
    %v425 = vmul.f32 %v423, %v424
    %v426 = vsub.f32 1.0, %v425
    %v427 = vmul.f32 %v424, %v426
    %v428 = vadd.f32 %v424, %v427
    %vm429 = vweird.f32 %v423
    %vm430 = vweird.f32 %v424
    %vm431 = vmor %vm429, %vm430
    %v432 = vsel %vm431, %v424, %v428
    %v433 = vand.u32 2147483647, %v423
    %vm434 = vcmp.eq.f32.partialorder %v433, 8.507059e+37
    %v435 = vand.u32 %v423, 2147483648
    %v436 = vor.u32 1.1754944e-38, %v435
    %v437 = vsel %vm434, %v436, %v432
    %v438 = vmul.f32 1.0, %v437
    %v439 = vtanh.pop %v419
    %v440 = vmul.f32 %v438, %v300
    %442 = vrot.lane.b32.xlu0 %v439, 64
    %v443 = vpop.permute.xlu0 %442
    %v445 = vmul.f32 %v438, %v443
    %447 = vrot.lane.b32.xlu0 %v445, 32
    %v448 = vpop.permute.xlu0 %447
    %v450 = vadd.f32 %v440, %v448
    %v451 = vtanh.pop %v450
    %453 = vrot.lane.b32.xlu0 %v451, 64
    %v454 = vpop.permute.xlu0 %453
    %v456 = vmul.f32 %v438, %v454
    %458 = vrot.lane.b32.xlu0 %v456, 32
    %v459 = vpop.permute.xlu0 %458
    %461 = vst.msk [vmem:[#allocation3 + $0x1] sm:$0x1] %vm311, %v459
    %v462 = vld [vmem:[#allocation2 + $0x2] sm:$0x1]
    %463 = vmatpush.msra.mxu0 0.0
    %464 = vmatpush.msra.mxu0 0.0
    %465 = vmatpush.msra.mxu0 0.0
    %466 = vmatpush.msra.mxu0 0.0
    %467 = vmatpush.msra.mxu0 0.0
    %468 = vmatpush.msra.mxu0 0.0
    %469 = vmatpush.msra.mxu0 0.0
    %470 = vmatpush.msra.mxu0 0.0
    %471 = vmatpush.msra.mxu0 0.0
    %472 = vmatpush.msra.mxu0 0.0
    %473 = vmatpush.msra.mxu0 0.0
    %474 = vmatpush.msra.mxu0 0.0
    %475 = vmatpush.msra.mxu0 %v151
    %476 = vmatpush.msra.mxu0 %v150
    %477 = vmatpush.msra.mxu0 %v149
    %478 = vmatpush.msra.mxu0 %v148
    %479 = vmatmul.f32.gmra.mxu0 %v397
    %v480 = vpop.f32.mrf.mxu0
    %v481 = vadd.f32 0.0, %v480
    %482 = vdwg.mxu0
    %v483 = vadd.f32 %v462, %v481
    %v484 = vxor.u32 %v483, 2147483648
    %v485 = vmul.f32 %v484, 1.442695
    %v486 = vpow.pop %v485
    %v487 = vadd.f32 %v486, 1.0
    %v488 = vrcp.pop %v487
    %v489 = vmul.f32 %v487, %v488
    %v490 = vsub.f32 1.0, %v489
    %v491 = vmul.f32 %v488, %v490
    %v492 = vadd.f32 %v488, %v491
    %vm493 = vweird.f32 %v487
    %vm494 = vweird.f32 %v488
    %vm495 = vmor %vm493, %vm494
    %v496 = vsel %vm495, %v488, %v492
    %v497 = vand.u32 2147483647, %v487
    %vm498 = vcmp.eq.f32.partialorder %v497, 8.507059e+37
    %v499 = vand.u32 %v487, 2147483648
    %v500 = vor.u32 1.1754944e-38, %v499
    %v501 = vsel %vm498, %v500, %v496
    %v502 = vmul.f32 1.0, %v501
    %v503 = vtanh.pop %v483
    %v504 = vmul.f32 %v502, %v365
    %506 = vrot.lane.b32.xlu0 %v503, 64
    %v507 = vpop.permute.xlu0 %506
    %v509 = vmul.f32 %v502, %v507
    %511 = vrot.lane.b32.xlu0 %v509, 32
    %v512 = vpop.permute.xlu0 %511
    %v514 = vadd.f32 %v504, %v512
    %v515 = vtanh.pop %v514
    %517 = vrot.lane.b32.xlu0 %v515, 64
    %v518 = vpop.permute.xlu0 %517
    %v520 = vmul.f32 %v502, %v518
    %v521 = vsel %vm162, %v459, 0
    %523 = vmatpush.msra.mxu0 0.0
    %524 = vmatpush.msra.mxu0 0.0
    %525 = vmatpush.msra.mxu0 0.0
    %526 = vmatpush.msra.mxu0 0.0
    %527 = vmatpush.msra.mxu0 0.0
    %528 = vmatpush.msra.mxu0 0.0
    %529 = vmatpush.msra.mxu0 0.0
    %530 = vmatpush.msra.mxu0 0.0
    %531 = vmatpush.msra.mxu0 0.0
    %532 = vmatpush.msra.mxu0 0.0
    %533 = vmatpush.msra.mxu0 0.0
    %534 = vmatpush.msra.mxu0 0.0
    %535 = vmatpush.msra.mxu0 %v159
    %536 = vmatpush.msra.mxu0 %v158
    %537 = vmatpush.msra.mxu0 %v157
    %538 = vmatpush.msra.mxu0 %v156
    %539 = vmatmul.f32.gmra.mxu0 %v521
    %v540 = vpop.f32.mrf.mxu0
    %v541 = vadd.f32 0.0, %v540
    %542 = vdwg.mxu0
    %544 = vrot.lane.b32.xlu0 %v520, 32
    %v545 = vpop.permute.xlu0 %544
    %v546 = vsel %vm162, %v545, 0
    %548 = vmatpush.msra.mxu0 0.0
    %549 = vmatpush.msra.mxu0 0.0
    %550 = vmatpush.msra.mxu0 0.0
    %551 = vmatpush.msra.mxu0 0.0
    %552 = vmatpush.msra.mxu0 0.0
    %553 = vmatpush.msra.mxu0 0.0
    %554 = vmatpush.msra.mxu0 0.0
    %555 = vmatpush.msra.mxu0 0.0
    %556 = vmatpush.msra.mxu0 0.0
    %557 = vmatpush.msra.mxu0 0.0
    %558 = vmatpush.msra.mxu0 0.0
    %559 = vmatpush.msra.mxu0 0.0
    %560 = vmatpush.msra.mxu0 %v155
    %561 = vmatpush.msra.mxu0 %v154
    %562 = vmatpush.msra.mxu0 %v153
    %563 = vmatpush.msra.mxu0 %v152
    %564 = vmatmul.f32.gmra.mxu0 %v546
    %v565 = vpop.f32.mrf.mxu0
    %v566 = vadd.f32 %v541, %v565
    %567 = vdwg.mxu0
    %v568 = vadd.f32 %v566, %v160
    %v569 = vxor.u32 %v568, 2147483648
    %v570 = vmul.f32 %v569, 1.442695
    %v571 = vpow.pop %v570
    %v572 = vadd.f32 %v571, 1.0
    %v573 = vrcp.pop %v572
    %v574 = vmul.f32 %v572, %v573
    %v575 = vsub.f32 1.0, %v574
    %v576 = vmul.f32 %v573, %v575
    %v577 = vadd.f32 %v573, %v576
    %vm578 = vweird.f32 %v572
    %vm579 = vweird.f32 %v573
    %vm580 = vmor %vm578, %vm579
    %v581 = vsel %vm580, %v573, %v577
    %v582 = vand.u32 2147483647, %v572
    %vm583 = vcmp.eq.f32.partialorder %v582, 8.507059e+37
    %v584 = vand.u32 %v572, 2147483648
    %v585 = vor.u32 1.1754944e-38, %v584
    %v586 = vsel %vm583, %v585, %v581
    %v587 = vmul.f32 1.0, %v586
    %v588 = vtanh.pop %v568
    %v589 = vmul.f32 %v587, %v450
    %591 = vrot.lane.b32.xlu0 %v588, 64
    %v592 = vpop.permute.xlu0 %591
    %v594 = vmul.f32 %v587, %v592
    %596 = vrot.lane.b32.xlu0 %v594, 32
    %v597 = vpop.permute.xlu0 %596
    %v599 = vadd.f32 %v589, %v597
    %v600 = vtanh.pop %v599
    %602 = vrot.lane.b32.xlu0 %v600, 64
    %v603 = vpop.permute.xlu0 %602
    %v605 = vmul.f32 %v587, %v603
    %607 = vrot.lane.b32.xlu0 %v605, 32
    %v608 = vpop.permute.xlu0 %607
    %610 = vst.msk [vmem:[#allocation3 + $0x2] sm:$0x1] %vm311, %v608
    %v611 = vld [vmem:[#allocation2 + $0x3] sm:$0x1]
    %612 = vmatpush.msra.mxu0 0.0
    %613 = vmatpush.msra.mxu0 0.0
    %614 = vmatpush.msra.mxu0 0.0
    %615 = vmatpush.msra.mxu0 0.0
    %616 = vmatpush.msra.mxu0 0.0
    %617 = vmatpush.msra.mxu0 0.0
    %618 = vmatpush.msra.mxu0 0.0
    %619 = vmatpush.msra.mxu0 0.0
    %620 = vmatpush.msra.mxu0 0.0
    %621 = vmatpush.msra.mxu0 0.0
    %622 = vmatpush.msra.mxu0 0.0
    %623 = vmatpush.msra.mxu0 0.0
    %624 = vmatpush.msra.mxu0 %v151
    %625 = vmatpush.msra.mxu0 %v150
    %626 = vmatpush.msra.mxu0 %v149
    %627 = vmatpush.msra.mxu0 %v148
    %628 = vmatmul.f32.gmra.mxu0 %v546
    %v629 = vpop.f32.mrf.mxu0
    %v630 = vadd.f32 0.0, %v629
    %631 = vdwg.mxu0
    %v632 = vadd.f32 %v611, %v630
    %v633 = vxor.u32 %v632, 2147483648
    %v634 = vmul.f32 %v633, 1.442695
    %v635 = vpow.pop %v634
    %v636 = vadd.f32 %v635, 1.0
    %v637 = vrcp.pop %v636
    %v638 = vmul.f32 %v636, %v637
    %v639 = vsub.f32 1.0, %v638
    %v640 = vmul.f32 %v637, %v639
    %v641 = vadd.f32 %v637, %v640
    %vm642 = vweird.f32 %v636
    %vm643 = vweird.f32 %v637
    %vm644 = vmor %vm642, %vm643
    %v645 = vsel %vm644, %v637, %v641
    %v646 = vand.u32 2147483647, %v636
    %vm647 = vcmp.eq.f32.partialorder %v646, 8.507059e+37
    %v648 = vand.u32 %v636, 2147483648
    %v649 = vor.u32 1.1754944e-38, %v648
    %v650 = vsel %vm647, %v649, %v645
    %v651 = vmul.f32 1.0, %v650
    %v652 = vtanh.pop %v632
    %v653 = vmul.f32 %v651, %v514
    %655 = vrot.lane.b32.xlu0 %v652, 64
    %v656 = vpop.permute.xlu0 %655
    %v658 = vmul.f32 %v651, %v656
    %660 = vrot.lane.b32.xlu0 %v658, 32
    %v661 = vpop.permute.xlu0 %660
    %v663 = vadd.f32 %v653, %v661
    %v664 = vtanh.pop %v663
    %666 = vrot.lane.b32.xlu0 %v664, 64
    %v667 = vpop.permute.xlu0 %666
    %v669 = vmul.f32 %v651, %v667
    %v670 = vsel %vm162, %v608, 0
    %672 = vmatpush.msra.mxu0 0.0
    %673 = vmatpush.msra.mxu0 0.0
    %674 = vmatpush.msra.mxu0 0.0
    %675 = vmatpush.msra.mxu0 0.0
    %676 = vmatpush.msra.mxu0 0.0
    %677 = vmatpush.msra.mxu0 0.0
    %678 = vmatpush.msra.mxu0 0.0
    %679 = vmatpush.msra.mxu0 0.0
    %680 = vmatpush.msra.mxu0 0.0
    %681 = vmatpush.msra.mxu0 0.0
    %682 = vmatpush.msra.mxu0 0.0
    %683 = vmatpush.msra.mxu0 0.0
    %684 = vmatpush.msra.mxu0 %v159
    %685 = vmatpush.msra.mxu0 %v158
    %686 = vmatpush.msra.mxu0 %v157
    %687 = vmatpush.msra.mxu0 %v156
    %688 = vmatmul.f32.gmra.mxu0 %v670
    %v689 = vpop.f32.mrf.mxu0
    %v690 = vadd.f32 0.0, %v689
    %691 = vdwg.mxu0
    %693 = vrot.lane.b32.xlu0 %v669, 32
    %v694 = vpop.permute.xlu0 %693
    %v695 = vsel %vm162, %v694, 0
    %697 = vmatpush.msra.mxu0 0.0
    %698 = vmatpush.msra.mxu0 0.0
    %699 = vmatpush.msra.mxu0 0.0
    %700 = vmatpush.msra.mxu0 0.0
    %701 = vmatpush.msra.mxu0 0.0
    %702 = vmatpush.msra.mxu0 0.0
    %703 = vmatpush.msra.mxu0 0.0
    %704 = vmatpush.msra.mxu0 0.0
    %705 = vmatpush.msra.mxu0 0.0
    %706 = vmatpush.msra.mxu0 0.0
    %707 = vmatpush.msra.mxu0 0.0
    %708 = vmatpush.msra.mxu0 0.0
    %709 = vmatpush.msra.mxu0 %v155
    %710 = vmatpush.msra.mxu0 %v154
    %711 = vmatpush.msra.mxu0 %v153
    %712 = vmatpush.msra.mxu0 %v152
    %713 = vmatmul.f32.gmra.mxu0 %v695
    %v714 = vpop.f32.mrf.mxu0
    %v715 = vadd.f32 %v690, %v714
    %716 = vdwg.mxu0
    %v717 = vadd.f32 %v715, %v160
    %v718 = vxor.u32 %v717, 2147483648
    %v719 = vmul.f32 %v718, 1.442695
    %v720 = vpow.pop %v719
    %v721 = vadd.f32 %v720, 1.0
    %v722 = vrcp.pop %v721
    %v723 = vmul.f32 %v721, %v722
    %v724 = vsub.f32 1.0, %v723
    %v725 = vmul.f32 %v722, %v724
    %v726 = vadd.f32 %v722, %v725
    %vm727 = vweird.f32 %v721
    %vm728 = vweird.f32 %v722
    %vm729 = vmor %vm727, %vm728
    %v730 = vsel %vm729, %v722, %v726
    %v731 = vand.u32 2147483647, %v721
    %vm732 = vcmp.eq.f32.partialorder %v731, 8.507059e+37
    %v733 = vand.u32 %v721, 2147483648
    %v734 = vor.u32 1.1754944e-38, %v733
    %v735 = vsel %vm732, %v734, %v730
    %v736 = vmul.f32 1.0, %v735
    %v737 = vtanh.pop %v717
    %v738 = vmul.f32 %v736, %v599
    %740 = vrot.lane.b32.xlu0 %v737, 64
    %v741 = vpop.permute.xlu0 %740
    %v743 = vmul.f32 %v736, %v741
    %745 = vrot.lane.b32.xlu0 %v743, 32
    %v746 = vpop.permute.xlu0 %745
    %v748 = vadd.f32 %v738, %v746
    %v749 = vtanh.pop %v748
    %751 = vrot.lane.b32.xlu0 %v749, 64
    %v752 = vpop.permute.xlu0 %751
    %v754 = vmul.f32 %v736, %v752
    %756 = vrot.lane.b32.xlu0 %v754, 32
    %v757 = vpop.permute.xlu0 %756
    %759 = vst.msk [vmem:[#allocation3 + $0x3] sm:$0x1] %vm311, %v757
    %v760 = vld [vmem:[#allocation2 + $0x4] sm:$0x1]
    %761 = vmatpush.msra.mxu0 0.0
    %762 = vmatpush.msra.mxu0 0.0
    %763 = vmatpush.msra.mxu0 0.0
    %764 = vmatpush.msra.mxu0 0.0
    %765 = vmatpush.msra.mxu0 0.0
    %766 = vmatpush.msra.mxu0 0.0
    %767 = vmatpush.msra.mxu0 0.0
    %768 = vmatpush.msra.mxu0 0.0
    %769 = vmatpush.msra.mxu0 0.0
    %770 = vmatpush.msra.mxu0 0.0
    %771 = vmatpush.msra.mxu0 0.0
    %772 = vmatpush.msra.mxu0 0.0
    %773 = vmatpush.msra.mxu0 %v151
    %774 = vmatpush.msra.mxu0 %v150
    %775 = vmatpush.msra.mxu0 %v149
    %776 = vmatpush.msra.mxu0 %v148
    %777 = vmatmul.f32.gmra.mxu0 %v695
    %v778 = vpop.f32.mrf.mxu0
    %v779 = vadd.f32 0.0, %v778
    %780 = vdwg.mxu0
    %v781 = vadd.f32 %v760, %v779
    %v782 = vxor.u32 %v781, 2147483648
    %v783 = vmul.f32 %v782, 1.442695
    %v784 = vpow.pop %v783
    %v785 = vadd.f32 %v784, 1.0
    %v786 = vrcp.pop %v785
    %v787 = vmul.f32 %v785, %v786
    %v788 = vsub.f32 1.0, %v787
    %v789 = vmul.f32 %v786, %v788
    %v790 = vadd.f32 %v786, %v789
    %vm791 = vweird.f32 %v785
    %vm792 = vweird.f32 %v786
    %vm793 = vmor %vm791, %vm792
    %v794 = vsel %vm793, %v786, %v790
    %v795 = vand.u32 2147483647, %v785
    %vm796 = vcmp.eq.f32.partialorder %v795, 8.507059e+37
    %v797 = vand.u32 %v785, 2147483648
    %v798 = vor.u32 1.1754944e-38, %v797
    %v799 = vsel %vm796, %v798, %v794
    %v800 = vmul.f32 1.0, %v799
    %v801 = vtanh.pop %v781
    %v802 = vmul.f32 %v800, %v663
    %804 = vrot.lane.b32.xlu0 %v801, 64
    %v805 = vpop.permute.xlu0 %804
    %v807 = vmul.f32 %v800, %v805
    %809 = vrot.lane.b32.xlu0 %v807, 32
    %v810 = vpop.permute.xlu0 %809
    %v812 = vadd.f32 %v802, %v810
    %v813 = vtanh.pop %v812
    %815 = vrot.lane.b32.xlu0 %v813, 64
    %v816 = vpop.permute.xlu0 %815
    %v818 = vmul.f32 %v800, %v816
    %v819 = vsel %vm162, %v757, 0
    %821 = vmatpush.msra.mxu0 0.0
    %822 = vmatpush.msra.mxu0 0.0
    %823 = vmatpush.msra.mxu0 0.0
    %824 = vmatpush.msra.mxu0 0.0
    %825 = vmatpush.msra.mxu0 0.0
    %826 = vmatpush.msra.mxu0 0.0
    %827 = vmatpush.msra.mxu0 0.0
    %828 = vmatpush.msra.mxu0 0.0
    %829 = vmatpush.msra.mxu0 0.0
    %830 = vmatpush.msra.mxu0 0.0
    %831 = vmatpush.msra.mxu0 0.0
    %832 = vmatpush.msra.mxu0 0.0
    %833 = vmatpush.msra.mxu0 %v159
    %834 = vmatpush.msra.mxu0 %v158
    %835 = vmatpush.msra.mxu0 %v157
    %836 = vmatpush.msra.mxu0 %v156
    %837 = vmatmul.f32.gmra.mxu0 %v819
    %v838 = vpop.f32.mrf.mxu0
    %v839 = vadd.f32 0.0, %v838
    %840 = vdwg.mxu0
    %842 = vrot.lane.b32.xlu0 %v818, 32
    %v843 = vpop.permute.xlu0 %842
    %v844 = vsel %vm162, %v843, 0
    %846 = vmatpush.msra.mxu0 0.0
    %847 = vmatpush.msra.mxu0 0.0
    %848 = vmatpush.msra.mxu0 0.0
    %849 = vmatpush.msra.mxu0 0.0
    %850 = vmatpush.msra.mxu0 0.0
    %851 = vmatpush.msra.mxu0 0.0
    %852 = vmatpush.msra.mxu0 0.0
    %853 = vmatpush.msra.mxu0 0.0
    %854 = vmatpush.msra.mxu0 0.0
    %855 = vmatpush.msra.mxu0 0.0
    %856 = vmatpush.msra.mxu0 0.0
    %857 = vmatpush.msra.mxu0 0.0
    %858 = vmatpush.msra.mxu0 %v155
    %859 = vmatpush.msra.mxu0 %v154
    %860 = vmatpush.msra.mxu0 %v153
    %861 = vmatpush.msra.mxu0 %v152
    %862 = vmatmul.f32.gmra.mxu0 %v844
    %v863 = vpop.f32.mrf.mxu0
    %v864 = vadd.f32 %v839, %v863
    %865 = vdwg.mxu0
    %v866 = vadd.f32 %v864, %v160
    %v867 = vxor.u32 %v866, 2147483648
    %v868 = vmul.f32 %v867, 1.442695
    %v869 = vpow.pop %v868
    %v870 = vadd.f32 %v869, 1.0
    %v871 = vrcp.pop %v870
    %v872 = vmul.f32 %v870, %v871
    %v873 = vsub.f32 1.0, %v872
    %v874 = vmul.f32 %v871, %v873
    %v875 = vadd.f32 %v871, %v874
    %vm876 = vweird.f32 %v870
    %vm877 = vweird.f32 %v871
    %vm878 = vmor %vm876, %vm877
    %v879 = vsel %vm878, %v871, %v875
    %v880 = vand.u32 2147483647, %v870
    %vm881 = vcmp.eq.f32.partialorder %v880, 8.507059e+37
    %v882 = vand.u32 %v870, 2147483648
    %v883 = vor.u32 1.1754944e-38, %v882
    %v884 = vsel %vm881, %v883, %v879
    %v885 = vmul.f32 1.0, %v884
    %v886 = vtanh.pop %v866
    %v887 = vmul.f32 %v885, %v748
    %889 = vrot.lane.b32.xlu0 %v886, 64
    %v890 = vpop.permute.xlu0 %889
    %v892 = vmul.f32 %v885, %v890
    %894 = vrot.lane.b32.xlu0 %v892, 32
    %v895 = vpop.permute.xlu0 %894
    %v897 = vadd.f32 %v887, %v895
    %v898 = vtanh.pop %v897
    %900 = vrot.lane.b32.xlu0 %v898, 64
    %v901 = vpop.permute.xlu0 %900
    %v903 = vmul.f32 %v885, %v901
    %905 = vrot.lane.b32.xlu0 %v903, 32
    %v906 = vpop.permute.xlu0 %905
    %908 = vst.msk [vmem:[#allocation3 + $0x4] sm:$0x1] %vm311, %v906
    %v909 = vld [vmem:[#allocation2 + $0x5] sm:$0x1]
    %910 = vmatpush.msra.mxu0 0.0
    %911 = vmatpush.msra.mxu0 0.0
    %912 = vmatpush.msra.mxu0 0.0
    %913 = vmatpush.msra.mxu0 0.0
    %914 = vmatpush.msra.mxu0 0.0
    %915 = vmatpush.msra.mxu0 0.0
    %916 = vmatpush.msra.mxu0 0.0
    %917 = vmatpush.msra.mxu0 0.0
    %918 = vmatpush.msra.mxu0 0.0
    %919 = vmatpush.msra.mxu0 0.0
    %920 = vmatpush.msra.mxu0 0.0
    %921 = vmatpush.msra.mxu0 0.0
    %922 = vmatpush.msra.mxu0 %v151
    %923 = vmatpush.msra.mxu0 %v150
    %924 = vmatpush.msra.mxu0 %v149
    %925 = vmatpush.msra.mxu0 %v148
    %926 = vmatmul.f32.gmra.mxu0 %v844
    %v927 = vpop.f32.mrf.mxu0
    %v928 = vadd.f32 0.0, %v927
    %929 = vdwg.mxu0
    %v930 = vadd.f32 %v909, %v928
    %v931 = vxor.u32 %v930, 2147483648
    %v932 = vmul.f32 %v931, 1.442695
    %v933 = vpow.pop %v932
    %v934 = vadd.f32 %v933, 1.0
    %v935 = vrcp.pop %v934
    %v936 = vmul.f32 %v934, %v935
    %v937 = vsub.f32 1.0, %v936
    %v938 = vmul.f32 %v935, %v937
    %v939 = vadd.f32 %v935, %v938
    %vm940 = vweird.f32 %v934
    %vm941 = vweird.f32 %v935
    %vm942 = vmor %vm940, %vm941
    %v943 = vsel %vm942, %v935, %v939
    %v944 = vand.u32 2147483647, %v934
    %vm945 = vcmp.eq.f32.partialorder %v944, 8.507059e+37
    %v946 = vand.u32 %v934, 2147483648
    %v947 = vor.u32 1.1754944e-38, %v946
    %v948 = vsel %vm945, %v947, %v943
    %v949 = vmul.f32 1.0, %v948
    %v950 = vtanh.pop %v930
    %v951 = vmul.f32 %v949, %v812
    %953 = vrot.lane.b32.xlu0 %v950, 64
    %v954 = vpop.permute.xlu0 %953
    %v956 = vmul.f32 %v949, %v954
    %958 = vrot.lane.b32.xlu0 %v956, 32
    %v959 = vpop.permute.xlu0 %958
    %v961 = vadd.f32 %v951, %v959
    %v962 = vtanh.pop %v961
    %964 = vrot.lane.b32.xlu0 %v962, 64
    %v965 = vpop.permute.xlu0 %964
    %v967 = vmul.f32 %v949, %v965
    %v968 = vsel %vm162, %v906, 0
    %970 = vmatpush.msra.mxu0 0.0
    %971 = vmatpush.msra.mxu0 0.0
    %972 = vmatpush.msra.mxu0 0.0
    %973 = vmatpush.msra.mxu0 0.0
    %974 = vmatpush.msra.mxu0 0.0
    %975 = vmatpush.msra.mxu0 0.0
    %976 = vmatpush.msra.mxu0 0.0
    %977 = vmatpush.msra.mxu0 0.0
    %978 = vmatpush.msra.mxu0 0.0
    %979 = vmatpush.msra.mxu0 0.0
    %980 = vmatpush.msra.mxu0 0.0
    %981 = vmatpush.msra.mxu0 0.0
    %982 = vmatpush.msra.mxu0 %v159
    %983 = vmatpush.msra.mxu0 %v158
    %984 = vmatpush.msra.mxu0 %v157
    %985 = vmatpush.msra.mxu0 %v156
    %986 = vmatmul.f32.gmra.mxu0 %v968
    %v987 = vpop.f32.mrf.mxu0
    %v988 = vadd.f32 0.0, %v987
    %989 = vdwg.mxu0
    %991 = vrot.lane.b32.xlu0 %v967, 32
    %v992 = vpop.permute.xlu0 %991
    %v993 = vsel %vm162, %v992, 0
    %995 = vmatpush.msra.mxu0 0.0
    %996 = vmatpush.msra.mxu0 0.0
    %997 = vmatpush.msra.mxu0 0.0
    %998 = vmatpush.msra.mxu0 0.0
    %999 = vmatpush.msra.mxu0 0.0
    %1000 = vmatpush.msra.mxu0 0.0
    %1001 = vmatpush.msra.mxu0 0.0
    %1002 = vmatpush.msra.mxu0 0.0
    %1003 = vmatpush.msra.mxu0 0.0
    %1004 = vmatpush.msra.mxu0 0.0
    %1005 = vmatpush.msra.mxu0 0.0
    %1006 = vmatpush.msra.mxu0 0.0
    %1007 = vmatpush.msra.mxu0 %v155
    %1008 = vmatpush.msra.mxu0 %v154
    %1009 = vmatpush.msra.mxu0 %v153
    %1010 = vmatpush.msra.mxu0 %v152
    %1011 = vmatmul.f32.gmra.mxu0 %v993
    %v1012 = vpop.f32.mrf.mxu0
    %v1013 = vadd.f32 %v988, %v1012
    %1014 = vdwg.mxu0
    %v1015 = vadd.f32 %v1013, %v160
    %v1016 = vxor.u32 %v1015, 2147483648
    %v1017 = vmul.f32 %v1016, 1.442695
    %v1018 = vpow.pop %v1017
    %v1019 = vadd.f32 %v1018, 1.0
    %v1020 = vrcp.pop %v1019
    %v1021 = vmul.f32 %v1019, %v1020
    %v1022 = vsub.f32 1.0, %v1021
    %v1023 = vmul.f32 %v1020, %v1022
    %v1024 = vadd.f32 %v1020, %v1023
    %vm1025 = vweird.f32 %v1019
    %vm1026 = vweird.f32 %v1020
    %vm1027 = vmor %vm1025, %vm1026
    %v1028 = vsel %vm1027, %v1020, %v1024
    %v1029 = vand.u32 2147483647, %v1019
    %vm1030 = vcmp.eq.f32.partialorder %v1029, 8.507059e+37
    %v1031 = vand.u32 %v1019, 2147483648
    %v1032 = vor.u32 1.1754944e-38, %v1031
    %v1033 = vsel %vm1030, %v1032, %v1028
    %v1034 = vmul.f32 1.0, %v1033
    %v1035 = vtanh.pop %v1015
    %v1036 = vmul.f32 %v1034, %v897
    %1038 = vrot.lane.b32.xlu0 %v1035, 64
    %v1039 = vpop.permute.xlu0 %1038
    %v1041 = vmul.f32 %v1034, %v1039
    %1043 = vrot.lane.b32.xlu0 %v1041, 32
    %v1044 = vpop.permute.xlu0 %1043
    %v1046 = vadd.f32 %v1036, %v1044
    %v1047 = vtanh.pop %v1046
    %1049 = vrot.lane.b32.xlu0 %v1047, 64
    %v1050 = vpop.permute.xlu0 %1049
    %v1052 = vmul.f32 %v1034, %v1050
    %1054 = vrot.lane.b32.xlu0 %v1052, 32
    %v1055 = vpop.permute.xlu0 %1054
    %1057 = vst.msk [vmem:[#allocation3 + $0x5] sm:$0x1] %vm311, %v1055
    %v1058 = vld [vmem:[#allocation2 + $0x6] sm:$0x1]
    %1059 = vmatpush.msra.mxu0 0.0
    %1060 = vmatpush.msra.mxu0 0.0
    %1061 = vmatpush.msra.mxu0 0.0
    %1062 = vmatpush.msra.mxu0 0.0
    %1063 = vmatpush.msra.mxu0 0.0
    %1064 = vmatpush.msra.mxu0 0.0
    %1065 = vmatpush.msra.mxu0 0.0
    %1066 = vmatpush.msra.mxu0 0.0
    %1067 = vmatpush.msra.mxu0 0.0
    %1068 = vmatpush.msra.mxu0 0.0
    %1069 = vmatpush.msra.mxu0 0.0
    %1070 = vmatpush.msra.mxu0 0.0
    %1071 = vmatpush.msra.mxu0 %v151
    %1072 = vmatpush.msra.mxu0 %v150
    %1073 = vmatpush.msra.mxu0 %v149
    %1074 = vmatpush.msra.mxu0 %v148
    %1075 = vmatmul.f32.gmra.mxu0 %v993
    %v1076 = vpop.f32.mrf.mxu0
    %v1077 = vadd.f32 0.0, %v1076
    %1078 = vdwg.mxu0
    %v1079 = vadd.f32 %v1058, %v1077
    %v1080 = vxor.u32 %v1079, 2147483648
    %v1081 = vmul.f32 %v1080, 1.442695
    %v1082 = vpow.pop %v1081
    %v1083 = vadd.f32 %v1082, 1.0
    %v1084 = vrcp.pop %v1083
    %v1085 = vmul.f32 %v1083, %v1084
    %v1086 = vsub.f32 1.0, %v1085
    %v1087 = vmul.f32 %v1084, %v1086
    %v1088 = vadd.f32 %v1084, %v1087
    %vm1089 = vweird.f32 %v1083
    %vm1090 = vweird.f32 %v1084
    %vm1091 = vmor %vm1089, %vm1090
    %v1092 = vsel %vm1091, %v1084, %v1088
    %v1093 = vand.u32 2147483647, %v1083
    %vm1094 = vcmp.eq.f32.partialorder %v1093, 8.507059e+37
    %v1095 = vand.u32 %v1083, 2147483648
    %v1096 = vor.u32 1.1754944e-38, %v1095
    %v1097 = vsel %vm1094, %v1096, %v1092
    %v1098 = vmul.f32 1.0, %v1097
    %v1099 = vtanh.pop %v1079
    %v1100 = vmul.f32 %v1098, %v961
    %1102 = vrot.lane.b32.xlu0 %v1099, 64
    %v1103 = vpop.permute.xlu0 %1102
    %v1105 = vmul.f32 %v1098, %v1103
    %1107 = vrot.lane.b32.xlu0 %v1105, 32
    %v1108 = vpop.permute.xlu0 %1107
    %v1110 = vadd.f32 %v1100, %v1108
    %v1111 = vtanh.pop %v1110
    %1113 = vrot.lane.b32.xlu0 %v1111, 64
    %v1114 = vpop.permute.xlu0 %1113
    %v1116 = vmul.f32 %v1098, %v1114
    %v1117 = vsel %vm162, %v1055, 0
    %1119 = vmatpush.msra.mxu0 0.0
    %1120 = vmatpush.msra.mxu0 0.0
    %1121 = vmatpush.msra.mxu0 0.0
    %1122 = vmatpush.msra.mxu0 0.0
    %1123 = vmatpush.msra.mxu0 0.0
    %1124 = vmatpush.msra.mxu0 0.0
    %1125 = vmatpush.msra.mxu0 0.0
    %1126 = vmatpush.msra.mxu0 0.0
    %1127 = vmatpush.msra.mxu0 0.0
    %1128 = vmatpush.msra.mxu0 0.0
    %1129 = vmatpush.msra.mxu0 0.0
    %1130 = vmatpush.msra.mxu0 0.0
    %1131 = vmatpush.msra.mxu0 %v159
    %1132 = vmatpush.msra.mxu0 %v158
    %1133 = vmatpush.msra.mxu0 %v157
    %1134 = vmatpush.msra.mxu0 %v156
    %1135 = vmatmul.f32.gmra.mxu0 %v1117
    %v1136 = vpop.f32.mrf.mxu0
    %v1137 = vadd.f32 0.0, %v1136
    %1138 = vdwg.mxu0
    %1140 = vrot.lane.b32.xlu0 %v1116, 32
    %v1141 = vpop.permute.xlu0 %1140
    %v1142 = vsel %vm162, %v1141, 0
    %1144 = vmatpush.msra.mxu0 0.0
    %1145 = vmatpush.msra.mxu0 0.0
    %1146 = vmatpush.msra.mxu0 0.0
    %1147 = vmatpush.msra.mxu0 0.0
    %1148 = vmatpush.msra.mxu0 0.0
    %1149 = vmatpush.msra.mxu0 0.0
    %1150 = vmatpush.msra.mxu0 0.0
    %1151 = vmatpush.msra.mxu0 0.0
    %1152 = vmatpush.msra.mxu0 0.0
    %1153 = vmatpush.msra.mxu0 0.0
    %1154 = vmatpush.msra.mxu0 0.0
    %1155 = vmatpush.msra.mxu0 0.0
    %1156 = vmatpush.msra.mxu0 %v155
    %1157 = vmatpush.msra.mxu0 %v154
    %1158 = vmatpush.msra.mxu0 %v153
    %1159 = vmatpush.msra.mxu0 %v152
    %1160 = vmatmul.f32.gmra.mxu0 %v1142
    %v1161 = vpop.f32.mrf.mxu0
    %v1162 = vadd.f32 %v1137, %v1161
    %1163 = vdwg.mxu0
    %v1164 = vadd.f32 %v1162, %v160
    %v1165 = vxor.u32 %v1164, 2147483648
    %v1166 = vmul.f32 %v1165, 1.442695
    %v1167 = vpow.pop %v1166
    %v1168 = vadd.f32 %v1167, 1.0
    %v1169 = vrcp.pop %v1168
    %v1170 = vmul.f32 %v1168, %v1169
    %v1171 = vsub.f32 1.0, %v1170
    %v1172 = vmul.f32 %v1169, %v1171
    %v1173 = vadd.f32 %v1169, %v1172
    %vm1174 = vweird.f32 %v1168
    %vm1175 = vweird.f32 %v1169
    %vm1176 = vmor %vm1174, %vm1175
    %v1177 = vsel %vm1176, %v1169, %v1173
    %v1178 = vand.u32 2147483647, %v1168
    %vm1179 = vcmp.eq.f32.partialorder %v1178, 8.507059e+37
    %v1180 = vand.u32 %v1168, 2147483648
    %v1181 = vor.u32 1.1754944e-38, %v1180
    %v1182 = vsel %vm1179, %v1181, %v1177
    %v1183 = vmul.f32 1.0, %v1182
    %v1184 = vtanh.pop %v1164
    %v1185 = vmul.f32 %v1183, %v1046
    %1187 = vrot.lane.b32.xlu0 %v1184, 64
    %v1188 = vpop.permute.xlu0 %1187
    %v1190 = vmul.f32 %v1183, %v1188
    %1192 = vrot.lane.b32.xlu0 %v1190, 32
    %v1193 = vpop.permute.xlu0 %1192
    %v1195 = vadd.f32 %v1185, %v1193
    %v1196 = vtanh.pop %v1195
    %1198 = vrot.lane.b32.xlu0 %v1196, 64
    %v1199 = vpop.permute.xlu0 %1198
    %v1201 = vmul.f32 %v1183, %v1199
    %1203 = vrot.lane.b32.xlu0 %v1201, 32
    %v1204 = vpop.permute.xlu0 %1203
    %1206 = vst.msk [vmem:[#allocation3 + $0x6] sm:$0x1] %vm311, %v1204
    %v1207 = vld [vmem:[#allocation2 + $0x7] sm:$0x1]
    %1208 = vmatpush.msra.mxu0 0.0
    %1209 = vmatpush.msra.mxu0 0.0
    %1210 = vmatpush.msra.mxu0 0.0
    %1211 = vmatpush.msra.mxu0 0.0
    %1212 = vmatpush.msra.mxu0 0.0
    %1213 = vmatpush.msra.mxu0 0.0
    %1214 = vmatpush.msra.mxu0 0.0
    %1215 = vmatpush.msra.mxu0 0.0
    %1216 = vmatpush.msra.mxu0 0.0
    %1217 = vmatpush.msra.mxu0 0.0
    %1218 = vmatpush.msra.mxu0 0.0
    %1219 = vmatpush.msra.mxu0 0.0
    %1220 = vmatpush.msra.mxu0 %v151
    %1221 = vmatpush.msra.mxu0 %v150
    %1222 = vmatpush.msra.mxu0 %v149
    %1223 = vmatpush.msra.mxu0 %v148
    %1224 = vmatmul.f32.gmra.mxu0 %v1142
    %v1225 = vpop.f32.mrf.mxu0
    %v1226 = vadd.f32 0.0, %v1225
    %1227 = vdwg.mxu0
    %v1228 = vadd.f32 %v1207, %v1226
    %v1229 = vxor.u32 %v1228, 2147483648
    %v1230 = vmul.f32 %v1229, 1.442695
    %v1231 = vpow.pop %v1230
    %v1232 = vadd.f32 %v1231, 1.0
    %v1233 = vrcp.pop %v1232
    %v1234 = vmul.f32 %v1232, %v1233
    %v1235 = vsub.f32 1.0, %v1234
    %v1236 = vmul.f32 %v1233, %v1235
    %v1237 = vadd.f32 %v1233, %v1236
    %vm1238 = vweird.f32 %v1232
    %vm1239 = vweird.f32 %v1233
    %vm1240 = vmor %vm1238, %vm1239
    %v1241 = vsel %vm1240, %v1233, %v1237
    %v1242 = vand.u32 2147483647, %v1232
    %vm1243 = vcmp.eq.f32.partialorder %v1242, 8.507059e+37
    %v1244 = vand.u32 %v1232, 2147483648
    %v1245 = vor.u32 1.1754944e-38, %v1244
    %v1246 = vsel %vm1243, %v1245, %v1241
    %v1247 = vmul.f32 1.0, %v1246
    %v1248 = vtanh.pop %v1228
    %v1249 = vmul.f32 %v1247, %v1110
    %1251 = vrot.lane.b32.xlu0 %v1248, 64
    %v1252 = vpop.permute.xlu0 %1251
    %v1254 = vmul.f32 %v1247, %v1252
    %1256 = vrot.lane.b32.xlu0 %v1254, 32
    %v1257 = vpop.permute.xlu0 %1256
    %v1259 = vadd.f32 %v1249, %v1257
    %v1260 = vtanh.pop %v1259
    %1262 = vrot.lane.b32.xlu0 %v1260, 64
    %v1263 = vpop.permute.xlu0 %1262
    %v1265 = vmul.f32 %v1247, %v1263
    %v1266 = vsel %vm162, %v1204, 0
    %1268 = vmatpush.msra.mxu0 0.0
    %1269 = vmatpush.msra.mxu0 0.0
    %1270 = vmatpush.msra.mxu0 0.0
    %1271 = vmatpush.msra.mxu0 0.0
    %1272 = vmatpush.msra.mxu0 0.0
    %1273 = vmatpush.msra.mxu0 0.0
    %1274 = vmatpush.msra.mxu0 0.0
    %1275 = vmatpush.msra.mxu0 0.0
    %1276 = vmatpush.msra.mxu0 0.0
    %1277 = vmatpush.msra.mxu0 0.0
    %1278 = vmatpush.msra.mxu0 0.0
    %1279 = vmatpush.msra.mxu0 0.0
    %1280 = vmatpush.msra.mxu0 %v159
    %1281 = vmatpush.msra.mxu0 %v158
    %1282 = vmatpush.msra.mxu0 %v157
    %1283 = vmatpush.msra.mxu0 %v156
    %1284 = vmatmul.f32.gmra.mxu0 %v1266
    %v1285 = vpop.f32.mrf.mxu0
    %v1286 = vadd.f32 0.0, %v1285
    %1287 = vdwg.mxu0
    %1289 = vrot.lane.b32.xlu0 %v1265, 32
    %v1290 = vpop.permute.xlu0 %1289
    %v1291 = vsel %vm162, %v1290, 0
    %1293 = vmatpush.msra.mxu0 0.0
    %1294 = vmatpush.msra.mxu0 0.0
    %1295 = vmatpush.msra.mxu0 0.0
    %1296 = vmatpush.msra.mxu0 0.0
    %1297 = vmatpush.msra.mxu0 0.0
    %1298 = vmatpush.msra.mxu0 0.0
    %1299 = vmatpush.msra.mxu0 0.0
    %1300 = vmatpush.msra.mxu0 0.0
    %1301 = vmatpush.msra.mxu0 0.0
    %1302 = vmatpush.msra.mxu0 0.0
    %1303 = vmatpush.msra.mxu0 0.0
    %1304 = vmatpush.msra.mxu0 0.0
    %1305 = vmatpush.msra.mxu0 %v155
    %1306 = vmatpush.msra.mxu0 %v154
    %1307 = vmatpush.msra.mxu0 %v153
    %1308 = vmatpush.msra.mxu0 %v152
    %1309 = vmatmul.f32.gmra.mxu0 %v1291
    %v1310 = vpop.f32.mrf.mxu0
    %v1311 = vadd.f32 %v1286, %v1310
    %1312 = vdwg.mxu0
    %v1313 = vadd.f32 %v1311, %v160
    %v1314 = vxor.u32 %v1313, 2147483648
    %v1315 = vmul.f32 %v1314, 1.442695
    %v1316 = vpow.pop %v1315
    %v1317 = vadd.f32 %v1316, 1.0
    %v1318 = vrcp.pop %v1317
    %v1319 = vmul.f32 %v1317, %v1318
    %v1320 = vsub.f32 1.0, %v1319
    %v1321 = vmul.f32 %v1318, %v1320
    %v1322 = vadd.f32 %v1318, %v1321
    %vm1323 = vweird.f32 %v1317
    %vm1324 = vweird.f32 %v1318
    %vm1325 = vmor %vm1323, %vm1324
    %v1326 = vsel %vm1325, %v1318, %v1322
    %v1327 = vand.u32 2147483647, %v1317
    %vm1328 = vcmp.eq.f32.partialorder %v1327, 8.507059e+37
    %v1329 = vand.u32 %v1317, 2147483648
    %v1330 = vor.u32 1.1754944e-38, %v1329
    %v1331 = vsel %vm1328, %v1330, %v1326
    %v1332 = vmul.f32 1.0, %v1331
    %v1333 = vtanh.pop %v1313
    %v1334 = vmul.f32 %v1332, %v1195
    %1336 = vrot.lane.b32.xlu0 %v1333, 64
    %v1337 = vpop.permute.xlu0 %1336
    %v1339 = vmul.f32 %v1332, %v1337
    %1341 = vrot.lane.b32.xlu0 %v1339, 32
    %v1342 = vpop.permute.xlu0 %1341
    %v1344 = vadd.f32 %v1334, %v1342
    %v1345 = vtanh.pop %v1344
    %1347 = vrot.lane.b32.xlu0 %v1345, 64
    %v1348 = vpop.permute.xlu0 %1347
    %v1350 = vmul.f32 %v1332, %v1348
    %1352 = vrot.lane.b32.xlu0 %v1350, 32
    %v1353 = vpop.permute.xlu0 %1352
    %1355 = vst.msk [vmem:[#allocation3 + $0x7] sm:$0x1] %vm311, %v1353
    %v1356 = vld [vmem:[#allocation3] sm:$0xff]
    %v1357 = vld [vmem:[#allocation12] sm:$0xff]
    %v1358 = vld [vmem:[#allocation12 + $0x8] sm:$0xff]
    %v1359 = vld [vmem:[#allocation12 + $0x10] sm:$0xff]
    %v1360 = vld [vmem:[#allocation12 + $0x18] sm:$0xff]
    %v1361 = vld [vmem:[%s8] sm:$0x1]
    %v1363 = vperm.slane %v1361, 0
    %v1366 = vsel %vm162, %v1356, 0
    %1368 = vmatpush.msra.mxu0 0.0
    %1369 = vmatpush.msra.mxu0 0.0
    %1370 = vmatpush.msra.mxu0 0.0
    %1371 = vmatpush.msra.mxu0 0.0
    %1372 = vmatpush.msra.mxu0 0.0
    %1373 = vmatpush.msra.mxu0 0.0
    %1374 = vmatpush.msra.mxu0 0.0
    %1375 = vmatpush.msra.mxu0 0.0
    %1376 = vmatpush.msra.mxu0 0.0
    %1377 = vmatpush.msra.mxu0 0.0
    %1378 = vmatpush.msra.mxu0 0.0
    %1379 = vmatpush.msra.mxu0 0.0
    %1380 = vmatpush.msra.mxu0 %v1360
    %1381 = vmatpush.msra.mxu0 %v1359
    %1382 = vmatpush.msra.mxu0 %v1358
    %1383 = vmatpush.msra.mxu0 %v1357
    %1384 = vmatmul.f32.gmra.mxu0 %v1366
    %v1385 = vpop.f32.mrf.mxu0
    %v1386 = vadd.f32 %v1363, %v1385
    %1387 = vdwg.mxu0
    %v1388 = vtanh.pop %v1386
    %v1389 = vld [vmem:[%s9] sm:$0xff]
    %v1390 = vld [vmem:[%s9 + $0x8] sm:$0xff]
    %v1391 = vld [vmem:[%s9 + $0x10] sm:$0xff]
    %v1392 = vld [vmem:[%s9 + $0x18] sm:$0xff]
    %v1393 = vld [vmem:[#allocation4] sm:$0x1]
    %v1395 = vperm.slane %v1393, 0
    %v1398 = vsel %vm162, %v1388, 0
    %1400 = vmatpush.msra.mxu0 0.0
    %1401 = vmatpush.msra.mxu0 0.0
    %1402 = vmatpush.msra.mxu0 0.0
    %1403 = vmatpush.msra.mxu0 0.0
    %1404 = vmatpush.msra.mxu0 0.0
    %1405 = vmatpush.msra.mxu0 0.0
    %1406 = vmatpush.msra.mxu0 0.0
    %1407 = vmatpush.msra.mxu0 0.0
    %1408 = vmatpush.msra.mxu0 0.0
    %1409 = vmatpush.msra.mxu0 0.0
    %1410 = vmatpush.msra.mxu0 0.0
    %1411 = vmatpush.msra.mxu0 0.0
    %1412 = vmatpush.msra.mxu0 %v1392
    %1413 = vmatpush.msra.mxu0 %v1391
    %1414 = vmatpush.msra.mxu0 %v1390
    %1415 = vmatpush.msra.mxu0 %v1389
    %1416 = vmatmul.f32.gmra.mxu0 %v1398
    %v1417 = vpop.f32.mrf.mxu0
    %v1418 = vadd.f32 %v1395, %v1417
    %1419 = vdwg.mxu0
    %vm1420 = vcmask 7168
    %1421 = vst.msk [vmem:[%s11] sm:$0xff] %vm1420, %v1418
    // Predicated region
    $region66: #{steering_forward.1} parent=1 // pred_check
      _
    $region67: #{steering_forward.1} parent=1 // pred_check_branch
      %1423 = sbr.rel (0) target = $region69
    $region68: #{steering_forward.1} parent=1 // pred_region
      _
    $region69: #{steering_forward.1} parent=1 // pred_fallthru
      _
    // Predicated region
    $region70: #{steering_forward.1} parent=1 // pred_check
      _
    $region71: #{steering_forward.1} parent=1 // pred_check_branch
      %1425 = sbr.rel (0) target = $region73
    $region72: #{steering_forward.1} parent=1 // pred_region
      _
    $region73: #{steering_forward.1} parent=1 // pred_fallthru
      _
    %1426 = vsyncpa [#allocation6], 1
    %1427 = vsyncpa [#allocation8], 1
    %1428 = vsyncpa [#allocation11], 1

</llo_original>
